<compile_context>
chip_gen: v5e
topology: v5e:2x2
jax: 0.10.0
libtpu: 0.0.40
codegen_flags: <defaults>
</compile_context>

<pallas_src>
import jax
import jax.numpy as jnp
from jax.experimental import pallas as pl
from jax.experimental.pallas import tpu as pltpu

# ----------------------------------------------------------------------------
# Original layer structure (matches torch.nn.Sequential in the reference).
# ----------------------------------------------------------------------------
_DIMS = (28 * 28, 256, 128, 64, 8, 32, 64, 28 * 28)
# ReLU after every layer except the encoder bottleneck (layer 3) and the final
# decoder output (layer 6).
_RELU = (True, True, True, False, True, True, False)
_NUM_LAYERS = len(_RELU)

# Fused structure used by the kernel: layers 3 & 4 folded (no ReLU between
# them), so 64->8->32 becomes a single 64->32 linear followed by ReLU.
_F_DIMS = (28 * 28, 256, 128, 64, 32, 64, 28 * 28)
_F_RELU = (True, True, True, True, True, False)
_N_FUSED = len(_F_RELU)


# ----------------------------------------------------------------------------
# Pallas kernel: full (folded) autoencoder forward for one row-tile of the
# batch.  refs = (w0, b0, w1, b1, ..., w5, b5, o_ref).  Weights are bf16
# (in, out); biases are f32 (1, out).  Hidden activations never leave
# VMEM/vregs.
# ----------------------------------------------------------------------------
def _fused_mlp_kernel(x_ref, *refs):
    o_ref = refs[-1]
    h = x_ref[...].astype(jnp.float32)
    for li in range(_N_FUSED):
        w = refs[2 * li][...]          # bf16 (in, out)
        b = refs[2 * li + 1][...]      # f32  (1, out)
        # bf16 MXU inputs, f32 accumulation; epilogue in f32.
        h = jnp.dot(h.astype(jnp.bfloat16), w,
                    preferred_element_type=jnp.float32) + b
        if _F_RELU[li]:
            h = jnp.maximum(h, 0.0)
    o_ref[...] = h.astype(o_ref.dtype)


# ----------------------------------------------------------------------------
# Wrapper
# ----------------------------------------------------------------------------
def _round_up(x, m):
    return ((x + m - 1) // m) * m


def _choose_tm(B):
    # Aim for >= 4 grid steps when the batch allows (2 per TensorCore on v7x,
    # and always some DMA/compute overlap), 8-row sublane granule, cap at 512
    # rows per step so two in+out f32 tile buffers stay far under 32 MiB VMEM.
    tm = _round_up(max(1, -(-B // 4)), 8)
    return max(8, min(512, tm))


def autoencoder_forward(kernel_params, x):
    """x: (B, ...) with prod(...) == 784 (e.g. (B, 1, 28, 28) or (B, 784)).

    kernel_params: flat list [w0, b0, ..., w5, b5] from prepare_kernel_params.
    """
    B = x.shape[0]
    x2 = x.reshape(B, -1).astype(jnp.float32)
    assert x2.shape[1] == _F_DIMS[0], x2.shape

    TM = _choose_tm(B)
    grid = (pl.cdiv(B, TM),)

    in_specs = [pl.BlockSpec((TM, _F_DIMS[0]), lambda i: (i, 0))]
    flat_args = [x2]
    for li in range(_N_FUSED):
        w = kernel_params[2 * li]
        b = kernel_params[2 * li + 1]
        # Whole weight / bias as one block, constant index_map -> loaded once,
        # resident in VMEM across all grid steps.
        in_specs.append(pl.BlockSpec(w.shape, lambda i: (0, 0)))
        in_specs.append(pl.BlockSpec(b.shape, lambda i: (0, 0)))
        flat_args += [w, b]

    out = pl.pallas_call(
        _fused_mlp_kernel,
        out_shape=jax.ShapeDtypeStruct((B, _F_DIMS[-1]), jnp.float32),
        grid=grid,
        in_specs=in_specs,
        out_specs=pl.BlockSpec((TM, _F_DIMS[-1]), lambda i: (i, 0)),
        compiler_params=pltpu.CompilerParams(
            dimension_semantics=("parallel",),   # shard row tiles across TCs
            vmem_limit_bytes=32 * 1024 * 1024,   # safe on v5e/v6e/v7x
        ),
    )(*flat_args)
    return out


# ----------------------------------------------------------------------------
# Parameter init: PyTorch nn.Linear default (U(-1/sqrt(fan_in), 1/sqrt(fan_in)))
# for the ORIGINAL 7 layers, weights stored pre-transposed as (in, out) and
# biases as (1, out), all f32 (used by the pure-JAX reference).
# ----------------------------------------------------------------------------
def init_params(key):
    params = {}
    keys = jax.random.split(key, 2 * _NUM_LAYERS)
    for li in range(_NUM_LAYERS):
        fan_in, fan_out = _DIMS[li], _DIMS[li + 1]
        bound = 1.0 / float(fan_in) ** 0.5
        params[f"w{li}"] = jax.random.uniform(
            keys[2 * li], (fan_in, fan_out), jnp.float32, -bound, bound)
        params[f"b{li}"] = jax.random.uniform(
            keys[2 * li + 1], (1, fan_out), jnp.float32, -bound, bound)
    return params


# ----------------------------------------------------------------------------
# One-time reformatting for the kernel: fold layers 3 & 4 (in f32), then cast
# weights to bf16.  Biases stay f32 (epilogue runs in f32).
# ----------------------------------------------------------------------------
def prepare_kernel_params(params):
    w34 = params["w3"] @ params["w4"]                      # (64, 8) @ (8, 32)
    b34 = params["b3"] @ params["w4"] + params["b4"]       # (1, 32)
    folded = [
        (params["w0"], params["b0"]),
        (params["w1"], params["b1"]),
        (params["w2"], params["b2"]),
        (w34, b34),
        (params["w5"], params["b5"]),
        (params["w6"], params["b6"]),
    ]
    flat = []
    for w, b in folded:
        flat.append(w.astype(jnp.bfloat16))
        flat.append(b.astype(jnp.float32))
    return flat


# ----------------------------------------------------------------------------
# Pure-JAX reference (original unfolded f32 network, for a sanity check).
# ----------------------------------------------------------------------------
def _reference_forward(params, x):
    h = x.reshape(x.shape[0], -1).astype(jnp.float32)
    for li in range(_NUM_LAYERS):
        h = h @ params[f"w{li}"] + params[f"b{li}"]
        if _RELU[li]:
            h = jnp.maximum(h, 0.0)
    return h


if __name__ == "__main__":
    x = jax.random.normal(jax.random.PRNGKey(0), (2, 1, 28, 28), dtype=jnp.float32)
    params = init_params(jax.random.PRNGKey(1))
    kparams = prepare_kernel_params(params)

    out = jax.jit(autoencoder_forward)(kparams, x)
    jax.block_until_ready(out)

    assert out.shape == (2, 28 * 28), out.shape
    assert out.dtype == jnp.float32
    assert bool(jnp.all(jnp.isfinite(out)))

    ref = _reference_forward(params, x)
    max_err = float(jnp.max(jnp.abs(out - ref)))
    assert max_err < 5e-2, f"mismatch vs reference: {max_err}"

    print("KERNEL_OK")
</pallas_src>

<mosaic_0001>
module attributes {stable_mosaic.version = 11 : i64} {
  func.func @_fused_mlp_kernel(%arg0: i32, %arg1: memref<8x784xf32, #tpu.memory_space<vmem>>, %arg2: memref<784x256xbf16, #tpu.memory_space<vmem>>, %arg3: memref<1x256xf32, #tpu.memory_space<vmem>>, %arg4: memref<256x128xbf16, #tpu.memory_space<vmem>>, %arg5: memref<1x128xf32, #tpu.memory_space<vmem>>, %arg6: memref<128x64xbf16, #tpu.memory_space<vmem>>, %arg7: memref<1x64xf32, #tpu.memory_space<vmem>>, %arg8: memref<64x32xbf16, #tpu.memory_space<vmem>>, %arg9: memref<1x32xf32, #tpu.memory_space<vmem>>, %arg10: memref<32x64xbf16, #tpu.memory_space<vmem>>, %arg11: memref<1x64xf32, #tpu.memory_space<vmem>>, %arg12: memref<64x784xbf16, #tpu.memory_space<vmem>>, %arg13: memref<1x784xf32, #tpu.memory_space<vmem>>, %arg14: memref<8x784xf32, #tpu.memory_space<vmem>>) attributes {dimension_semantics = [#tpu.dimension_semantics<parallel>], iteration_bounds = array<i64: 1>, scalar_prefetch = 0 : i64, scratch_operands = 0 : i64, tpu.core_type = #tpu.core_type<tc>, window_params = [{transform_indices = @transform_0, window_bounds = array<i64: 8, 784>}, {pipeline_mode = #tpu.pipeline_mode<synchronous>, transform_indices = @transform_1, window_bounds = array<i64: 784, 256>}, {pipeline_mode = #tpu.pipeline_mode<synchronous>, transform_indices = @transform_2, window_bounds = array<i64: 1, 256>}, {pipeline_mode = #tpu.pipeline_mode<synchronous>, transform_indices = @transform_3, window_bounds = array<i64: 256, 128>}, {pipeline_mode = #tpu.pipeline_mode<synchronous>, transform_indices = @transform_4, window_bounds = array<i64: 1, 128>}, {pipeline_mode = #tpu.pipeline_mode<synchronous>, transform_indices = @transform_5, window_bounds = array<i64: 128, 64>}, {pipeline_mode = #tpu.pipeline_mode<synchronous>, transform_indices = @transform_6, window_bounds = array<i64: 1, 64>}, {pipeline_mode = #tpu.pipeline_mode<synchronous>, transform_indices = @transform_7, window_bounds = array<i64: 64, 32>}, {pipeline_mode = #tpu.pipeline_mode<synchronous>, transform_indices = @transform_8, window_bounds = array<i64: 1, 32>}, {pipeline_mode = #tpu.pipeline_mode<synchronous>, transform_indices = @transform_9, window_bounds = array<i64: 32, 64>}, {pipeline_mode = #tpu.pipeline_mode<synchronous>, transform_indices = @transform_10, window_bounds = array<i64: 1, 64>}, {pipeline_mode = #tpu.pipeline_mode<synchronous>, transform_indices = @transform_11, window_bounds = array<i64: 64, 784>}, {pipeline_mode = #tpu.pipeline_mode<synchronous>, transform_indices = @transform_12, window_bounds = array<i64: 1, 784>}, {transform_indices = @transform_13, window_bounds = array<i64: 8, 784>}]} {
    %c0 = arith.constant 0 : index
    %c0_0 = arith.constant 0 : index
    %0 = vector.load %arg1[%c0, %c0_0] : memref<8x784xf32, #tpu.memory_space<vmem>>, vector<8x784xf32>
    %c0_1 = arith.constant 0 : index
    %c0_2 = arith.constant 0 : index
    %1 = vector.load %arg2[%c0_1, %c0_2] : memref<784x256xbf16, #tpu.memory_space<vmem>>, vector<784x256xbf16>
    %c0_3 = arith.constant 0 : index
    %c0_4 = arith.constant 0 : index
    %2 = vector.load %arg3[%c0_3, %c0_4] : memref<1x256xf32, #tpu.memory_space<vmem>>, vector<1x256xf32>
    %3 = arith.truncf %0 : vector<8x784xf32> to vector<8x784xbf16>
    %cst = arith.constant dense<0.000000e+00> : vector<8x256xf32>
    %4 = tpu.matmul %3, %1, %cst {dimension_numbers = #tpu.dot_dimension_numbers<[1], [0], [0], [1], [0, 0, 1, 1], [], []>} : vector<8x784xbf16>, vector<784x256xbf16>, vector<8x256xf32> -> vector<8x256xf32>
    %5 = vector.broadcast %2 : vector<1x256xf32> to vector<8x256xf32>
    %6 = arith.addf %4, %5 : vector<8x256xf32>
    %cst_5 = arith.constant 0.000000e+00 : f32
    %7 = vector.broadcast %cst_5 : f32 to vector<8x256xf32>
    %8 = arith.maximumf %6, %7 : vector<8x256xf32>
    %c0_6 = arith.constant 0 : index
    %c0_7 = arith.constant 0 : index
    %9 = vector.load %arg4[%c0_6, %c0_7] : memref<256x128xbf16, #tpu.memory_space<vmem>>, vector<256x128xbf16>
    %c0_8 = arith.constant 0 : index
    %c0_9 = arith.constant 0 : index
    %10 = vector.load %arg5[%c0_8, %c0_9] : memref<1x128xf32, #tpu.memory_space<vmem>>, vector<1x128xf32>
    %11 = arith.truncf %8 : vector<8x256xf32> to vector<8x256xbf16>
    %cst_10 = arith.constant dense<0.000000e+00> : vector<8x128xf32>
    %12 = tpu.matmul %11, %9, %cst_10 {dimension_numbers = #tpu.dot_dimension_numbers<[1], [0], [0], [1], [0, 0, 1, 1], [], []>} : vector<8x256xbf16>, vector<256x128xbf16>, vector<8x128xf32> -> vector<8x128xf32>
    %13 = vector.broadcast %10 : vector<1x128xf32> to vector<8x128xf32>
    %14 = arith.addf %12, %13 : vector<8x128xf32>
    %cst_11 = arith.constant 0.000000e+00 : f32
    %15 = vector.broadcast %cst_11 : f32 to vector<8x128xf32>
    %16 = arith.maximumf %14, %15 : vector<8x128xf32>
    %c0_12 = arith.constant 0 : index
    %c0_13 = arith.constant 0 : index
    %17 = vector.load %arg6[%c0_12, %c0_13] : memref<128x64xbf16, #tpu.memory_space<vmem>>, vector<128x64xbf16>
    %c0_14 = arith.constant 0 : index
    %c0_15 = arith.constant 0 : index
    %18 = vector.load %arg7[%c0_14, %c0_15] : memref<1x64xf32, #tpu.memory_space<vmem>>, vector<1x64xf32>
    %19 = arith.truncf %16 : vector<8x128xf32> to vector<8x128xbf16>
    %cst_16 = arith.constant dense<0.000000e+00> : vector<8x64xf32>
    %20 = tpu.matmul %19, %17, %cst_16 {dimension_numbers = #tpu.dot_dimension_numbers<[1], [0], [0], [1], [0, 0, 1, 1], [], []>} : vector<8x128xbf16>, vector<128x64xbf16>, vector<8x64xf32> -> vector<8x64xf32>
    %21 = vector.broadcast %18 : vector<1x64xf32> to vector<8x64xf32>
    %22 = arith.addf %20, %21 : vector<8x64xf32>
    %cst_17 = arith.constant 0.000000e+00 : f32
    %23 = vector.broadcast %cst_17 : f32 to vector<8x64xf32>
    %24 = arith.maximumf %22, %23 : vector<8x64xf32>
    %c0_18 = arith.constant 0 : index
    %c0_19 = arith.constant 0 : index
    %25 = vector.load %arg8[%c0_18, %c0_19] : memref<64x32xbf16, #tpu.memory_space<vmem>>, vector<64x32xbf16>
    %c0_20 = arith.constant 0 : index
    %c0_21 = arith.constant 0 : index
    %26 = vector.load %arg9[%c0_20, %c0_21] : memref<1x32xf32, #tpu.memory_space<vmem>>, vector<1x32xf32>
    %27 = arith.truncf %24 : vector<8x64xf32> to vector<8x64xbf16>
    %cst_22 = arith.constant dense<0.000000e+00> : vector<8x32xf32>
    %28 = tpu.matmul %27, %25, %cst_22 {dimension_numbers = #tpu.dot_dimension_numbers<[1], [0], [0], [1], [0, 0, 1, 1], [], []>} : vector<8x64xbf16>, vector<64x32xbf16>, vector<8x32xf32> -> vector<8x32xf32>
    %29 = vector.broadcast %26 : vector<1x32xf32> to vector<8x32xf32>
    %30 = arith.addf %28, %29 : vector<8x32xf32>
    %cst_23 = arith.constant 0.000000e+00 : f32
    %31 = vector.broadcast %cst_23 : f32 to vector<8x32xf32>
    %32 = arith.maximumf %30, %31 : vector<8x32xf32>
    %c0_24 = arith.constant 0 : index
    %c0_25 = arith.constant 0 : index
    %33 = vector.load %arg10[%c0_24, %c0_25] : memref<32x64xbf16, #tpu.memory_space<vmem>>, vector<32x64xbf16>
    %c0_26 = arith.constant 0 : index
    %c0_27 = arith.constant 0 : index
    %34 = vector.load %arg11[%c0_26, %c0_27] : memref<1x64xf32, #tpu.memory_space<vmem>>, vector<1x64xf32>
    %35 = arith.truncf %32 : vector<8x32xf32> to vector<8x32xbf16>
    %cst_28 = arith.constant dense<0.000000e+00> : vector<8x64xf32>
    %36 = tpu.matmul %35, %33, %cst_28 {dimension_numbers = #tpu.dot_dimension_numbers<[1], [0], [0], [1], [0, 0, 1, 1], [], []>} : vector<8x32xbf16>, vector<32x64xbf16>, vector<8x64xf32> -> vector<8x64xf32>
    %37 = vector.broadcast %34 : vector<1x64xf32> to vector<8x64xf32>
    %38 = arith.addf %36, %37 : vector<8x64xf32>
    %cst_29 = arith.constant 0.000000e+00 : f32
    %39 = vector.broadcast %cst_29 : f32 to vector<8x64xf32>
    %40 = arith.maximumf %38, %39 : vector<8x64xf32>
    %c0_30 = arith.constant 0 : index
    %c0_31 = arith.constant 0 : index
    %41 = vector.load %arg12[%c0_30, %c0_31] : memref<64x784xbf16, #tpu.memory_space<vmem>>, vector<64x784xbf16>
    %c0_32 = arith.constant 0 : index
    %c0_33 = arith.constant 0 : index
    %42 = vector.load %arg13[%c0_32, %c0_33] : memref<1x784xf32, #tpu.memory_space<vmem>>, vector<1x784xf32>
    %43 = arith.truncf %40 : vector<8x64xf32> to vector<8x64xbf16>
    %cst_34 = arith.constant dense<0.000000e+00> : vector<8x784xf32>
    %44 = tpu.matmul %43, %41, %cst_34 {dimension_numbers = #tpu.dot_dimension_numbers<[1], [0], [0], [1], [0, 0, 1, 1], [], []>} : vector<8x64xbf16>, vector<64x784xbf16>, vector<8x784xf32> -> vector<8x784xf32>
    %45 = vector.broadcast %42 : vector<1x784xf32> to vector<8x784xf32>
    %46 = arith.addf %44, %45 : vector<8x784xf32>
    %c0_35 = arith.constant 0 : index
    %c0_36 = arith.constant 0 : index
    %47 = vector.load %arg14[%c0_35, %c0_36] : memref<8x784xf32, #tpu.memory_space<vmem>>, vector<8x784xf32>
    tpu.vector_store %arg14[%c0_35, %c0_36], %46 {strides = array<i32>} : memref<8x784xf32, #tpu.memory_space<vmem>>, vector<8x784xf32>,
    return
  }
  func.func @transform_0(%arg0: i32) -> (i32, i32) {
    %c0_i32 = arith.constant 0 : i32
    %c0_i32_0 = arith.constant 0 : i32
    return %arg0, %c0_i32 : i32, i32
  }
  func.func @transform_1(%arg0: i32) -> (i32, i32) {
    %c0_i32 = arith.constant 0 : i32
    %c0_i32_0 = arith.constant 0 : i32
    %c0_i32_1 = arith.constant 0 : i32
    return %c0_i32, %c0_i32_0 : i32, i32
  }
  func.func @transform_2(%arg0: i32) -> (i32, i32) {
    %c0_i32 = arith.constant 0 : i32
    %c0_i32_0 = arith.constant 0 : i32
    %c0_i32_1 = arith.constant 0 : i32
    return %c0_i32, %c0_i32_0 : i32, i32
  }
  func.func @transform_3(%arg0: i32) -> (i32, i32) {
    %c0_i32 = arith.constant 0 : i32
    %c0_i32_0 = arith.constant 0 : i32
    %c0_i32_1 = arith.constant 0 : i32
    return %c0_i32, %c0_i32_0 : i32, i32
  }
  func.func @transform_4(%arg0: i32) -> (i32, i32) {
    %c0_i32 = arith.constant 0 : i32
    %c0_i32_0 = arith.constant 0 : i32
    %c0_i32_1 = arith.constant 0 : i32
    return %c0_i32, %c0_i32_0 : i32, i32
  }
  func.func @transform_5(%arg0: i32) -> (i32, i32) {
    %c0_i32 = arith.constant 0 : i32
    %c0_i32_0 = arith.constant 0 : i32
    %c0_i32_1 = arith.constant 0 : i32
    return %c0_i32, %c0_i32_0 : i32, i32
  }
  func.func @transform_6(%arg0: i32) -> (i32, i32) {
    %c0_i32 = arith.constant 0 : i32
    %c0_i32_0 = arith.constant 0 : i32
    %c0_i32_1 = arith.constant 0 : i32
    return %c0_i32, %c0_i32_0 : i32, i32
  }
  func.func @transform_7(%arg0: i32) -> (i32, i32) {
    %c0_i32 = arith.constant 0 : i32
    %c0_i32_0 = arith.constant 0 : i32
    %c0_i32_1 = arith.constant 0 : i32
    return %c0_i32, %c0_i32_0 : i32, i32
  }
  func.func @transform_8(%arg0: i32) -> (i32, i32) {
    %c0_i32 = arith.constant 0 : i32
    %c0_i32_0 = arith.constant 0 : i32
    %c0_i32_1 = arith.constant 0 : i32
    return %c0_i32, %c0_i32_0 : i32, i32
  }
  func.func @transform_9(%arg0: i32) -> (i32, i32) {
    %c0_i32 = arith.constant 0 : i32
    %c0_i32_0 = arith.constant 0 : i32
    %c0_i32_1 = arith.constant 0 : i32
    return %c0_i32, %c0_i32_0 : i32, i32
  }
  func.func @transform_10(%arg0: i32) -> (i32, i32) {
    %c0_i32 = arith.constant 0 : i32
    %c0_i32_0 = arith.constant 0 : i32
    %c0_i32_1 = arith.constant 0 : i32
    return %c0_i32, %c0_i32_0 : i32, i32
  }
  func.func @transform_11(%arg0: i32) -> (i32, i32) {
    %c0_i32 = arith.constant 0 : i32
    %c0_i32_0 = arith.constant 0 : i32
    %c0_i32_1 = arith.constant 0 : i32
    return %c0_i32, %c0_i32_0 : i32, i32
  }
  func.func @transform_12(%arg0: i32) -> (i32, i32) {
    %c0_i32 = arith.constant 0 : i32
    %c0_i32_0 = arith.constant 0 : i32
    %c0_i32_1 = arith.constant 0 : i32
    return %c0_i32, %c0_i32_0 : i32, i32
  }
  func.func @transform_13(%arg0: i32) -> (i32, i32) {
    %c0_i32 = arith.constant 0 : i32
    %c0_i32_0 = arith.constant 0 : i32
    return %arg0, %c0_i32 : i32, i32
  }
}

</mosaic_0001>

<llo_original>
// kernel: autoencoder_forward.1
$region0: #{autoencoder_forward.1}
  #allocation0 [shape = 'u32[]', space=smem, size = 0x4, offset = 0x4, fixed_abs, tag = 'smem constant byte address 0x4 - core index']
  #allocation1 [shape = 'u32[72,128]{1,0:T(1,128)}', space=vmem, size = 0x9000, scoped, tag = 'internal scratch']
  %s0 = inlined_call_operand.vmem [shape: f32[2,784], index: 0, kind: input, shape index: {}]
  %s1 = inlined_call_operand.hbm [shape: bf16[784,256], index: 1, kind: input, shape index: {}]
  %s2 = inlined_call_operand.vmem [shape: f32[1,256], index: 2, kind: input, shape index: {}]
  %s3 = inlined_call_operand.vmem [shape: bf16[256,128], index: 3, kind: input, shape index: {}]
  %s4 = inlined_call_operand.vmem [shape: f32[1,128], index: 4, kind: input, shape index: {}]
  %s5 = inlined_call_operand.vmem [shape: bf16[128,64], index: 5, kind: input, shape index: {}]
  %s6 = inlined_call_operand.vmem [shape: f32[1,64], index: 6, kind: input, shape index: {}]
  %s7 = inlined_call_operand.vmem [shape: bf16[64,32], index: 7, kind: input, shape index: {}]
  %s8 = inlined_call_operand.vmem [shape: f32[1,32], index: 8, kind: input, shape index: {}]
  %s9 = inlined_call_operand.vmem [shape: bf16[32,64], index: 9, kind: input, shape index: {}]
  %s10 = inlined_call_operand.vmem [shape: f32[1,64], index: 10, kind: input, shape index: {}]
  %s11 = inlined_call_operand.hbm [shape: bf16[64,784], index: 11, kind: input, shape index: {}]
  %s12 = inlined_call_operand.vmem [shape: f32[1,784], index: 12, kind: input, shape index: {}]
  %s13 = inlined_call_operand.hbm [shape: f32[2,784], index: 13, kind: output, shape index: {}]
  %s14 = sld [smem:[#allocation0]]
  $region70: #{autoencoder_forward.1} parent=0
    _
  %s16 = ssub.s32 1, %s14
  %s17 = scalar_select 0, %s16, %s14
  $region1: #{autoencoder_forward.1} parent=0
    #allocation2 [shape = 'u8[401408]{0}', space=vmem, size = 0x62000, scoped, tag = 'input window, operand 1, single buffered']
    #allocation3 [shape = 's32[1]{0}', space=sflag, size = 0x4, scoped, tag = 'scoped memory for autoencoder_forward.1']
    #allocation4 [shape = 's32[1]{0}', space=sflag, size = 0x4, scoped, tag = 'scoped memory for autoencoder_forward.1']
    #allocation5 [shape = 'u8[114688]{0}', space=vmem, size = 0x1c000, scoped, tag = 'input window, operand 11, single buffered']
    #allocation6 [shape = 's32[1]{0}', space=sflag, size = 0x4, scoped, tag = 'scoped memory for autoencoder_forward.1']
    #allocation7 [shape = 'u8[28672]{0}', space=vmem, size = 0x7000, scoped, tag = 'output window, operand 0, single buffered']
    %18 = vsyncpa [#allocation3], 0
    %19 = vsyncpa [#allocation6], 0
    %20 = vsyncpa [#allocation4], 0
    // Predicated region
    $region2: #{autoencoder_forward.1} parent=1 // pred_check
      _
    $region3: #{autoencoder_forward.1} parent=1 // pred_check_branch
      %22 = sbr.rel (0) target = $region5
    $region4: #{autoencoder_forward.1} parent=1 // pred_region
      _
    $region5: #{autoencoder_forward.1} parent=1 // pred_fallthru
      _
    // Predicated region
    $region6: #{autoencoder_forward.1} parent=1 // pred_check
      _
    $region7: #{autoencoder_forward.1} parent=1 // pred_check_branch
      %24 = sbr.rel (0) target = $region9
    $region8: #{autoencoder_forward.1} parent=1 // pred_region
      %26 = vsyncadd [#allocation3], 0
      %s27 = sshll.u32 %s1, 4
      %s28 = int_to_ptr.hbm [resolvable:$true] %s27
      %s29 = sshll.u32 [#allocation2], 4
      %s30 = int_to_ptr.vmem [resolvable:$true] %s29
      %35 = dma.hbm_to_vmem [thread:$0]  %s28, 12544, %s30, [#allocation3], 128, 128, 8
    $region9: #{autoencoder_forward.1} parent=1 // pred_fallthru
      _
    // Predicated region
    $region10: #{autoencoder_forward.1} parent=1 // pred_check
      _
    $region11: #{autoencoder_forward.1} parent=1 // pred_check_branch
      %37 = sbr.rel (0) target = $region13
    $region12: #{autoencoder_forward.1} parent=1 // pred_region
      _
    $region13: #{autoencoder_forward.1} parent=1 // pred_fallthru
      _
    // Predicated region
    $region14: #{autoencoder_forward.1} parent=1 // pred_check
      _
    $region15: #{autoencoder_forward.1} parent=1 // pred_check_branch
      %39 = sbr.rel (0) target = $region17
    $region16: #{autoencoder_forward.1} parent=1 // pred_region
      _
    $region17: #{autoencoder_forward.1} parent=1 // pred_fallthru
      _
    // Predicated region
    $region18: #{autoencoder_forward.1} parent=1 // pred_check
      _
    $region19: #{autoencoder_forward.1} parent=1 // pred_check_branch
      %41 = sbr.rel (0) target = $region21
    $region20: #{autoencoder_forward.1} parent=1 // pred_region
      _
    $region21: #{autoencoder_forward.1} parent=1 // pred_fallthru
      _
    // Predicated region
    $region22: #{autoencoder_forward.1} parent=1 // pred_check
      _
    $region23: #{autoencoder_forward.1} parent=1 // pred_check_branch
      %43 = sbr.rel (0) target = $region25
    $region24: #{autoencoder_forward.1} parent=1 // pred_region
      _
    $region25: #{autoencoder_forward.1} parent=1 // pred_fallthru
      _
    // Predicated region
    $region26: #{autoencoder_forward.1} parent=1 // pred_check
      _
    $region27: #{autoencoder_forward.1} parent=1 // pred_check_branch
      %45 = sbr.rel (0) target = $region29
    $region28: #{autoencoder_forward.1} parent=1 // pred_region
      _
    $region29: #{autoencoder_forward.1} parent=1 // pred_fallthru
      _
    // Predicated region
    $region30: #{autoencoder_forward.1} parent=1 // pred_check
      _
    $region31: #{autoencoder_forward.1} parent=1 // pred_check_branch
      %47 = sbr.rel (0) target = $region33
    $region32: #{autoencoder_forward.1} parent=1 // pred_region
      _
    $region33: #{autoencoder_forward.1} parent=1 // pred_fallthru
      _
    // Predicated region
    $region34: #{autoencoder_forward.1} parent=1 // pred_check
      _
    $region35: #{autoencoder_forward.1} parent=1 // pred_check_branch
      %49 = sbr.rel (0) target = $region37
    $region36: #{autoencoder_forward.1} parent=1 // pred_region
      _
    $region37: #{autoencoder_forward.1} parent=1 // pred_fallthru
      _
    // Predicated region
    $region38: #{autoencoder_forward.1} parent=1 // pred_check
      _
    $region39: #{autoencoder_forward.1} parent=1 // pred_check_branch
      %51 = sbr.rel (0) target = $region41
    $region40: #{autoencoder_forward.1} parent=1 // pred_region
      _
    $region41: #{autoencoder_forward.1} parent=1 // pred_fallthru
      _
    // Predicated region
    $region42: #{autoencoder_forward.1} parent=1 // pred_check
      _
    $region43: #{autoencoder_forward.1} parent=1 // pred_check_branch
      %53 = sbr.rel (0) target = $region45
    $region44: #{autoencoder_forward.1} parent=1 // pred_region
      _
    $region45: #{autoencoder_forward.1} parent=1 // pred_fallthru
      _
    // Predicated region
    $region46: #{autoencoder_forward.1} parent=1 // pred_check
      _
    $region47: #{autoencoder_forward.1} parent=1 // pred_check_branch
      %55 = sbr.rel (0) target = $region49
    $region48: #{autoencoder_forward.1} parent=1 // pred_region
      %57 = vsyncadd [#allocation6], 0
      %s58 = sshll.u32 %s11, 4
      %s59 = int_to_ptr.hbm [resolvable:$true] %s58
      %s60 = sshll.u32 [#allocation5], 4
      %s61 = int_to_ptr.vmem [resolvable:$true] %s60
      %66 = dma.hbm_to_vmem [thread:$0]  %s59, 3584, %s61, [#allocation6], 448, 448, 28
    $region49: #{autoencoder_forward.1} parent=1 // pred_fallthru
      _
    // Predicated region
    $region50: #{autoencoder_forward.1} parent=1 // pred_check
      _
    $region51: #{autoencoder_forward.1} parent=1 // pred_check_branch
      %68 = sbr.rel (0) target = $region53
    $region52: #{autoencoder_forward.1} parent=1 // pred_region
      _
    $region53: #{autoencoder_forward.1} parent=1 // pred_fallthru
      _
    // Predicated region
    $region54: #{autoencoder_forward.1} parent=1 // pred_check
      _
    $region55: #{autoencoder_forward.1} parent=1 // pred_check_branch
      %70 = sbr.rel (0) target = $region57
    $region56: #{autoencoder_forward.1} parent=1 // pred_region
      %72 = dma.done [#allocation3], 12544
    $region57: #{autoencoder_forward.1} parent=1 // pred_fallthru
      _
    // Predicated region
    $region58: #{autoencoder_forward.1} parent=1 // pred_check
      _
    $region59: #{autoencoder_forward.1} parent=1 // pred_check_branch
      %74 = sbr.rel (0) target = $region61
    $region60: #{autoencoder_forward.1} parent=1 // pred_region
      %76 = dma.done [#allocation6], 3584
    $region61: #{autoencoder_forward.1} parent=1 // pred_fallthru
      _
    %v78 = vld [vmem:[%s0] sm:$0xff]
    %v79 = vld [vmem:[%s0 + $0x8] sm:$0x3f]
    %v80 = vld [vmem:[%s0 + $0xe] sm:$0xff]
    %v81 = vld [vmem:[%s0 + $0x16] sm:$0x3f]
    %v82 = vld [vmem:[%s0 + $0x1c] sm:$0xff]
    %v83 = vld [vmem:[%s0 + $0x24] sm:$0x3f]
    %v84 = vld [vmem:[%s0 + $0x2a] sm:$0xff]
    %v85 = vld [vmem:[%s0 + $0x32] sm:$0x3f]
    %v86 = vld [vmem:[#allocation2] sm:$0xff]
    %v87 = vld [vmem:[#allocation2 + $0x8] sm:$0xff]
    %v88 = vld [vmem:[#allocation2 + $0x10] sm:$0xff]
    %v89 = vld [vmem:[#allocation2 + $0x18] sm:$0xff]
    %v90 = vld [vmem:[#allocation2 + $0x20] sm:$0xff]
    %v91 = vld [vmem:[#allocation2 + $0x28] sm:$0xff]
    %v92 = vld [vmem:[#allocation2 + $0x30] sm:$0xff]
    %v93 = vld [vmem:[#allocation2 + $0x38] sm:$0xff]
    %v94 = vld [vmem:[#allocation2 + $0x40] sm:$0xff]
    %v95 = vld [vmem:[#allocation2 + $0x48] sm:$0xff]
    %v96 = vld [vmem:[#allocation2 + $0x50] sm:$0xff]
    %v97 = vld [vmem:[#allocation2 + $0x58] sm:$0xff]
    %v98 = vld [vmem:[#allocation2 + $0x60] sm:$0xff]
    %v99 = vld [vmem:[#allocation2 + $0x68] sm:$0xff]
    %v100 = vld [vmem:[#allocation2 + $0x70] sm:$0xff]
    %v101 = vld [vmem:[#allocation2 + $0x78] sm:$0xff]
    %v102 = vld [vmem:[#allocation2 + $0x80] sm:$0xff]
    %v103 = vld [vmem:[#allocation2 + $0x88] sm:$0xff]
    %v104 = vld [vmem:[#allocation2 + $0x90] sm:$0xff]
    %v105 = vld [vmem:[#allocation2 + $0x98] sm:$0xff]
    %v106 = vld [vmem:[#allocation2 + $0xa0] sm:$0xff]
    %v107 = vld [vmem:[#allocation2 + $0xa8] sm:$0xff]
    %v108 = vld [vmem:[#allocation2 + $0xb0] sm:$0xff]
    %v109 = vld [vmem:[#allocation2 + $0xb8] sm:$0xff]
    %v110 = vld [vmem:[#allocation2 + $0xc0] sm:$0xff]
    %v111 = vld [vmem:[#allocation2 + $0xc8] sm:$0xff]
    %v112 = vld [vmem:[#allocation2 + $0xd0] sm:$0xff]
    %v113 = vld [vmem:[#allocation2 + $0xd8] sm:$0xff]
    %v114 = vld [vmem:[#allocation2 + $0xe0] sm:$0xff]
    %v115 = vld [vmem:[#allocation2 + $0xe8] sm:$0xff]
    %v116 = vld [vmem:[#allocation2 + $0xf0] sm:$0xff]
    %v117 = vld [vmem:[#allocation2 + $0xf8] sm:$0xff]
    %v118 = vld [vmem:[#allocation2 + $0x100] sm:$0xff]
    %v119 = vld [vmem:[#allocation2 + $0x108] sm:$0xff]
    %v120 = vld [vmem:[#allocation2 + $0x110] sm:$0xff]
    %v121 = vld [vmem:[#allocation2 + $0x118] sm:$0xff]
    %v122 = vld [vmem:[#allocation2 + $0x120] sm:$0xff]
    %v123 = vld [vmem:[#allocation2 + $0x128] sm:$0xff]
    %v124 = vld [vmem:[#allocation2 + $0x130] sm:$0xff]
    %v125 = vld [vmem:[#allocation2 + $0x138] sm:$0xff]
    %v126 = vld [vmem:[#allocation2 + $0x140] sm:$0xff]
    %v127 = vld [vmem:[#allocation2 + $0x148] sm:$0xff]
    %v128 = vld [vmem:[#allocation2 + $0x150] sm:$0xff]
    %v129 = vld [vmem:[#allocation2 + $0x158] sm:$0xff]
    %v130 = vld [vmem:[#allocation2 + $0x160] sm:$0xff]
    %v131 = vld [vmem:[#allocation2 + $0x168] sm:$0xff]
    %v132 = vld [vmem:[#allocation2 + $0x170] sm:$0xff]
    %v133 = vld [vmem:[#allocation2 + $0x178] sm:$0xff]
    %v134 = vld [vmem:[#allocation2 + $0x180] sm:$0xff]
    %v135 = vld [vmem:[#allocation2 + $0x188] sm:$0xff]
    %v136 = vld [vmem:[#allocation2 + $0x190] sm:$0xff]
    %v137 = vld [vmem:[#allocation2 + $0x198] sm:$0xff]
    %v138 = vld [vmem:[#allocation2 + $0x1a0] sm:$0xff]
    %v139 = vld [vmem:[#allocation2 + $0x1a8] sm:$0xff]
    %v140 = vld [vmem:[#allocation2 + $0x1b0] sm:$0xff]
    %v141 = vld [vmem:[#allocation2 + $0x1b8] sm:$0xff]
    %v142 = vld [vmem:[#allocation2 + $0x1c0] sm:$0xff]
    %v143 = vld [vmem:[#allocation2 + $0x1c8] sm:$0xff]
    %v144 = vld [vmem:[#allocation2 + $0x1d0] sm:$0xff]
    %v145 = vld [vmem:[#allocation2 + $0x1d8] sm:$0xff]
    %v146 = vld [vmem:[#allocation2 + $0x1e0] sm:$0xff]
    %v147 = vld [vmem:[#allocation2 + $0x1e8] sm:$0xff]
    %v148 = vld [vmem:[#allocation2 + $0x1f0] sm:$0xff]
    %v149 = vld [vmem:[#allocation2 + $0x1f8] sm:$0xff]
    %v150 = vld [vmem:[#allocation2 + $0x200] sm:$0xff]
    %v151 = vld [vmem:[#allocation2 + $0x208] sm:$0xff]
    %v152 = vld [vmem:[#allocation2 + $0x210] sm:$0xff]
    %v153 = vld [vmem:[#allocation2 + $0x218] sm:$0xff]
    %v154 = vld [vmem:[#allocation2 + $0x220] sm:$0xff]
    %v155 = vld [vmem:[#allocation2 + $0x228] sm:$0xff]
    %v156 = vld [vmem:[#allocation2 + $0x230] sm:$0xff]
    %v157 = vld [vmem:[#allocation2 + $0x238] sm:$0xff]
    %v158 = vld [vmem:[#allocation2 + $0x240] sm:$0xff]
    %v159 = vld [vmem:[#allocation2 + $0x248] sm:$0xff]
    %v160 = vld [vmem:[#allocation2 + $0x250] sm:$0xff]
    %v161 = vld [vmem:[#allocation2 + $0x258] sm:$0xff]
    %v162 = vld [vmem:[#allocation2 + $0x260] sm:$0xff]
    %v163 = vld [vmem:[#allocation2 + $0x268] sm:$0xff]
    %v164 = vld [vmem:[#allocation2 + $0x270] sm:$0xff]
    %v165 = vld [vmem:[#allocation2 + $0x278] sm:$0xff]
    %v166 = vld [vmem:[#allocation2 + $0x280] sm:$0xff]
    %v167 = vld [vmem:[#allocation2 + $0x288] sm:$0xff]
    %v168 = vld [vmem:[#allocation2 + $0x290] sm:$0xff]
    %v169 = vld [vmem:[#allocation2 + $0x298] sm:$0xff]
    %v170 = vld [vmem:[#allocation2 + $0x2a0] sm:$0xff]
    %v171 = vld [vmem:[#allocation2 + $0x2a8] sm:$0xff]
    %v172 = vld [vmem:[#allocation2 + $0x2b0] sm:$0xff]
    %v173 = vld [vmem:[#allocation2 + $0x2b8] sm:$0xff]
    %v174 = vld [vmem:[#allocation2 + $0x2c0] sm:$0xff]
    %v175 = vld [vmem:[#allocation2 + $0x2c8] sm:$0xff]
    %v176 = vld [vmem:[#allocation2 + $0x2d0] sm:$0xff]
    %v177 = vld [vmem:[#allocation2 + $0x2d8] sm:$0xff]
    %v178 = vld [vmem:[#allocation2 + $0x2e0] sm:$0xff]
    %v179 = vld [vmem:[#allocation2 + $0x2e8] sm:$0xff]
    %v180 = vld [vmem:[#allocation2 + $0x2f0] sm:$0xff]
    %v181 = vld [vmem:[#allocation2 + $0x2f8] sm:$0xff]
    %v182 = vld [vmem:[#allocation2 + $0x300] sm:$0xff]
    %v183 = vld [vmem:[#allocation2 + $0x308] sm:$0xff]
    %v184 = vld [vmem:[%s2] sm:$0x3]
    %193 = vst [vmem:[#allocation1] ss:$4 sm:$0xff] %v78
    %s194 = scalar_lea.vmem [#allocation1], 1
    %195 = vst [vmem:[%s194] ss:$4 sm:$0xff] %v80
    %s196 = scalar_lea.vmem [#allocation1], 2
    %197 = vst [vmem:[%s196] ss:$4 sm:$0xff] %v82
    %s198 = scalar_lea.vmem [#allocation1], 3
    %199 = vst [vmem:[%s198] ss:$4 sm:$0xff] %v84
    %s200 = scalar_lea.vmem [#allocation1], 32
    %201 = vst [vmem:[%s200] ss:$4 sm:$0xff] %v79
    %s202 = scalar_lea.vmem [#allocation1], 33
    %203 = vst [vmem:[%s202] ss:$4 sm:$0xff] %v81
    %s204 = scalar_lea.vmem [#allocation1], 34
    %205 = vst [vmem:[%s204] ss:$4 sm:$0xff] %v83
    %s206 = scalar_lea.vmem [#allocation1], 35
    %207 = vst [vmem:[%s206] ss:$4 sm:$0xff] %v85
    %v208 = vld.sshfl [vmem:[#allocation1] sm:$0xff pattern:$0x73625140]
    %v209 = vld.sshfl [vmem:[#allocation1 + $0x8] sm:$0xff pattern:$0x73625140]
    %v210 = vld.sshfl [vmem:[#allocation1 + $0x10] sm:$0xff pattern:$0x73625140]
    %v211 = vld.sshfl [vmem:[#allocation1 + $0x18] sm:$0xff pattern:$0x73625140]
    %v212 = vld.sshfl [vmem:[#allocation1 + $0x20] sm:$0xff pattern:$0x73625140]
    %v213 = vld.sshfl [vmem:[#allocation1 + $0x28] sm:$0xff pattern:$0x73625140]
    %v214 = vld.sshfl [vmem:[#allocation1 + $0x30] sm:$0xff pattern:$0x73625140]
    %v222 = vpack.c.bf16 %v208, %v208
    %v223 = vpack.c.bf16 %v209, %v209
    %v224 = vpack.c.bf16 %v210, %v210
    %v225 = vpack.c.bf16 %v211, %v211
    %v226 = vpack.c.bf16 %v212, %v212
    %v227 = vpack.c.bf16 %v213, %v213
    %v228 = vpack.c.bf16 %v214, %v214
    %v230 = vperm.slane %v184, 0
    %v231 = vperm.slane %v184, 1
    %v332 = vunpack.c.l.b16 %v86
    %v333 = vunpack.c.h.b16 %v86
    %v334 = vunpack.c.l.b16 %v87
    %v335 = vunpack.c.h.b16 %v87
    %v336 = vunpack.c.l.b16 %v88
    %v337 = vunpack.c.h.b16 %v88
    %v338 = vunpack.c.l.b16 %v89
    %v339 = vunpack.c.h.b16 %v89
    %v340 = vunpack.c.l.b16 %v90
    %v341 = vunpack.c.h.b16 %v90
    %v342 = vunpack.c.l.b16 %v91
    %v343 = vunpack.c.h.b16 %v91
    %v344 = vunpack.c.l.b16 %v92
    %v345 = vunpack.c.h.b16 %v92
    %v346 = vunpack.c.l.b16 %v93
    %v347 = vunpack.c.h.b16 %v93
    %v348 = vunpack.c.l.b16 %v94
    %v349 = vunpack.c.h.b16 %v94
    %v350 = vunpack.c.l.b16 %v95
    %v351 = vunpack.c.h.b16 %v95
    %v352 = vunpack.c.l.b16 %v96
    %v353 = vunpack.c.h.b16 %v96
    %v354 = vunpack.c.l.b16 %v97
    %v355 = vunpack.c.h.b16 %v97
    %v356 = vunpack.c.l.b16 %v98
    %v357 = vunpack.c.h.b16 %v98
    %v358 = vunpack.c.l.b16 %v99
    %v359 = vunpack.c.h.b16 %v99
    %v360 = vunpack.c.l.b16 %v100
    %v361 = vunpack.c.h.b16 %v100
    %v362 = vunpack.c.l.b16 %v101
    %v363 = vunpack.c.h.b16 %v101
    %v364 = vunpack.c.l.b16 %v102
    %v365 = vunpack.c.h.b16 %v102
    %v366 = vunpack.c.l.b16 %v103
    %v367 = vunpack.c.h.b16 %v103
    %v368 = vunpack.c.l.b16 %v104
    %v369 = vunpack.c.h.b16 %v104
    %v370 = vunpack.c.l.b16 %v105
    %v371 = vunpack.c.h.b16 %v105
    %v372 = vunpack.c.l.b16 %v106
    %v373 = vunpack.c.h.b16 %v106
    %v374 = vunpack.c.l.b16 %v107
    %v375 = vunpack.c.h.b16 %v107
    %v376 = vunpack.c.l.b16 %v108
    %v377 = vunpack.c.h.b16 %v108
    %v378 = vunpack.c.l.b16 %v109
    %v379 = vunpack.c.h.b16 %v109
    %v380 = vunpack.c.l.b16 %v110
    %v381 = vunpack.c.h.b16 %v110
    %v382 = vunpack.c.l.b16 %v111
    %v383 = vunpack.c.h.b16 %v111
    %v384 = vunpack.c.l.b16 %v112
    %v385 = vunpack.c.h.b16 %v112
    %v386 = vunpack.c.l.b16 %v113
    %v387 = vunpack.c.h.b16 %v113
    %v388 = vunpack.c.l.b16 %v114
    %v389 = vunpack.c.h.b16 %v114
    %v390 = vunpack.c.l.b16 %v115
    %v391 = vunpack.c.h.b16 %v115
    %v392 = vunpack.c.l.b16 %v116
    %v393 = vunpack.c.h.b16 %v116
    %v394 = vunpack.c.l.b16 %v117
    %v395 = vunpack.c.h.b16 %v117
    %v396 = vunpack.c.l.b16 %v118
    %v397 = vunpack.c.h.b16 %v118
    %v398 = vunpack.c.l.b16 %v119
    %v399 = vunpack.c.h.b16 %v119
    %v400 = vunpack.c.l.b16 %v120
    %v401 = vunpack.c.h.b16 %v120
    %v402 = vunpack.c.l.b16 %v121
    %v403 = vunpack.c.h.b16 %v121
    %v404 = vunpack.c.l.b16 %v122
    %v405 = vunpack.c.h.b16 %v122
    %v406 = vunpack.c.l.b16 %v123
    %v407 = vunpack.c.h.b16 %v123
    %v408 = vunpack.c.l.b16 %v124
    %v409 = vunpack.c.h.b16 %v124
    %v410 = vunpack.c.l.b16 %v125
    %v411 = vunpack.c.h.b16 %v125
    %v412 = vunpack.c.l.b16 %v126
    %v413 = vunpack.c.h.b16 %v126
    %v414 = vunpack.c.l.b16 %v127
    %v415 = vunpack.c.h.b16 %v127
    %v416 = vunpack.c.l.b16 %v128
    %v417 = vunpack.c.h.b16 %v128
    %v418 = vunpack.c.l.b16 %v129
    %v419 = vunpack.c.h.b16 %v129
    %v420 = vunpack.c.l.b16 %v130
    %v421 = vunpack.c.h.b16 %v130
    %v422 = vunpack.c.l.b16 %v131
    %v423 = vunpack.c.h.b16 %v131
    %v424 = vunpack.c.l.b16 %v132
    %v425 = vunpack.c.h.b16 %v132
    %v426 = vunpack.c.l.b16 %v133
    %v427 = vunpack.c.h.b16 %v133
    %v428 = vunpack.c.l.b16 %v134
    %v429 = vunpack.c.h.b16 %v134
    %v430 = vunpack.c.l.b16 %v135
    %v431 = vunpack.c.h.b16 %v135
    %v432 = vunpack.c.l.b16 %v136
    %v433 = vunpack.c.h.b16 %v136
    %v434 = vunpack.c.l.b16 %v137
    %v435 = vunpack.c.h.b16 %v137
    %v436 = vunpack.c.l.b16 %v138
    %v437 = vunpack.c.h.b16 %v138
    %v438 = vunpack.c.l.b16 %v139
    %v439 = vunpack.c.h.b16 %v139
    %v440 = vunpack.c.l.b16 %v140
    %v441 = vunpack.c.h.b16 %v140
    %v442 = vunpack.c.l.b16 %v141
    %v443 = vunpack.c.h.b16 %v141
    %v444 = vunpack.c.l.b16 %v142
    %v445 = vunpack.c.h.b16 %v142
    %v446 = vunpack.c.l.b16 %v143
    %v447 = vunpack.c.h.b16 %v143
    %v448 = vunpack.c.l.b16 %v144
    %v449 = vunpack.c.h.b16 %v144
    %v450 = vunpack.c.l.b16 %v145
    %v451 = vunpack.c.h.b16 %v145
    %v452 = vunpack.c.l.b16 %v146
    %v453 = vunpack.c.h.b16 %v146
    %v454 = vunpack.c.l.b16 %v147
    %v455 = vunpack.c.h.b16 %v147
    %v456 = vunpack.c.l.b16 %v148
    %v457 = vunpack.c.h.b16 %v148
    %v458 = vunpack.c.l.b16 %v149
    %v459 = vunpack.c.h.b16 %v149
    %v460 = vunpack.c.l.b16 %v150
    %v461 = vunpack.c.h.b16 %v150
    %v462 = vunpack.c.l.b16 %v151
    %v463 = vunpack.c.h.b16 %v151
    %v464 = vunpack.c.l.b16 %v152
    %v465 = vunpack.c.h.b16 %v152
    %v466 = vunpack.c.l.b16 %v153
    %v467 = vunpack.c.h.b16 %v153
    %v468 = vunpack.c.l.b16 %v154
    %v469 = vunpack.c.h.b16 %v154
    %v470 = vunpack.c.l.b16 %v155
    %v471 = vunpack.c.h.b16 %v155
    %v472 = vunpack.c.l.b16 %v156
    %v473 = vunpack.c.h.b16 %v156
    %v474 = vunpack.c.l.b16 %v157
    %v475 = vunpack.c.h.b16 %v157
    %v476 = vunpack.c.l.b16 %v158
    %v477 = vunpack.c.h.b16 %v158
    %v478 = vunpack.c.l.b16 %v159
    %v479 = vunpack.c.h.b16 %v159
    %v480 = vunpack.c.l.b16 %v160
    %v481 = vunpack.c.h.b16 %v160
    %v482 = vunpack.c.l.b16 %v161
    %v483 = vunpack.c.h.b16 %v161
    %v484 = vunpack.c.l.b16 %v162
    %v485 = vunpack.c.h.b16 %v162
    %v486 = vunpack.c.l.b16 %v163
    %v487 = vunpack.c.h.b16 %v163
    %v488 = vunpack.c.l.b16 %v164
    %v489 = vunpack.c.h.b16 %v164
    %v490 = vunpack.c.l.b16 %v165
    %v491 = vunpack.c.h.b16 %v165
    %v492 = vunpack.c.l.b16 %v166
    %v493 = vunpack.c.h.b16 %v166
    %v494 = vunpack.c.l.b16 %v167
    %v495 = vunpack.c.h.b16 %v167
    %v496 = vunpack.c.l.b16 %v168
    %v497 = vunpack.c.h.b16 %v168
    %v498 = vunpack.c.l.b16 %v169
    %v499 = vunpack.c.h.b16 %v169
    %v500 = vunpack.c.l.b16 %v170
    %v501 = vunpack.c.h.b16 %v170
    %v502 = vunpack.c.l.b16 %v171
    %v503 = vunpack.c.h.b16 %v171
    %v504 = vunpack.c.l.b16 %v172
    %v505 = vunpack.c.h.b16 %v172
    %v506 = vunpack.c.l.b16 %v173
    %v507 = vunpack.c.h.b16 %v173
    %v508 = vunpack.c.l.b16 %v174
    %v509 = vunpack.c.h.b16 %v174
    %v510 = vunpack.c.l.b16 %v175
    %v511 = vunpack.c.h.b16 %v175
    %v512 = vunpack.c.l.b16 %v176
    %v513 = vunpack.c.h.b16 %v176
    %v514 = vunpack.c.l.b16 %v177
    %v515 = vunpack.c.h.b16 %v177
    %v516 = vunpack.c.l.b16 %v178
    %v517 = vunpack.c.h.b16 %v178
    %v518 = vunpack.c.l.b16 %v179
    %v519 = vunpack.c.h.b16 %v179
    %v520 = vunpack.c.l.b16 %v180
    %v521 = vunpack.c.h.b16 %v180
    %v522 = vunpack.c.l.b16 %v181
    %v523 = vunpack.c.h.b16 %v181
    %v524 = vunpack.c.l.b16 %v182
    %v525 = vunpack.c.h.b16 %v182
    %v526 = vunpack.c.l.b16 %v183
    %v527 = vunpack.c.h.b16 %v183
    %v528 = vpack.c.b16 %v334, %v332
    %v529 = vpack.c.b16 %v335, %v333
    %v530 = vpack.c.b16 %v338, %v336
    %v531 = vpack.c.b16 %v339, %v337
    %v532 = vpack.c.b16 %v342, %v340
    %v533 = vpack.c.b16 %v343, %v341
    %v534 = vpack.c.b16 %v346, %v344
    %v535 = vpack.c.b16 %v347, %v345
    %v536 = vpack.c.b16 %v350, %v348
    %v537 = vpack.c.b16 %v351, %v349
    %v538 = vpack.c.b16 %v354, %v352
    %v539 = vpack.c.b16 %v355, %v353
    %v540 = vpack.c.b16 %v358, %v356
    %v541 = vpack.c.b16 %v359, %v357
    %v542 = vpack.c.b16 %v362, %v360
    %v543 = vpack.c.b16 %v363, %v361
    %v544 = vpack.c.b16 %v366, %v364
    %v545 = vpack.c.b16 %v367, %v365
    %v546 = vpack.c.b16 %v370, %v368
    %v547 = vpack.c.b16 %v371, %v369
    %v548 = vpack.c.b16 %v374, %v372
    %v549 = vpack.c.b16 %v375, %v373
    %v550 = vpack.c.b16 %v378, %v376
    %v551 = vpack.c.b16 %v379, %v377
    %v552 = vpack.c.b16 %v382, %v380
    %v553 = vpack.c.b16 %v383, %v381
    %v554 = vpack.c.b16 %v386, %v384
    %v555 = vpack.c.b16 %v387, %v385
    %v556 = vpack.c.b16 %v390, %v388
    %v557 = vpack.c.b16 %v391, %v389
    %v558 = vpack.c.b16 %v394, %v392
    %v559 = vpack.c.b16 %v395, %v393
    %v560 = vpack.c.b16 %v398, %v396
    %v561 = vpack.c.b16 %v399, %v397
    %v562 = vpack.c.b16 %v402, %v400
    %v563 = vpack.c.b16 %v403, %v401
    %v564 = vpack.c.b16 %v406, %v404
    %v565 = vpack.c.b16 %v407, %v405
    %v566 = vpack.c.b16 %v410, %v408
    %v567 = vpack.c.b16 %v411, %v409
    %v568 = vpack.c.b16 %v414, %v412
    %v569 = vpack.c.b16 %v415, %v413
    %v570 = vpack.c.b16 %v418, %v416
    %v571 = vpack.c.b16 %v419, %v417
    %v572 = vpack.c.b16 %v422, %v420
    %v573 = vpack.c.b16 %v423, %v421
    %v574 = vpack.c.b16 %v426, %v424
    %v575 = vpack.c.b16 %v427, %v425
    %v576 = vpack.c.b16 %v430, %v428
    %v577 = vpack.c.b16 %v431, %v429
    %v578 = vpack.c.b16 %v434, %v432
    %v579 = vpack.c.b16 %v435, %v433
    %v580 = vpack.c.b16 %v438, %v436
    %v581 = vpack.c.b16 %v439, %v437
    %v582 = vpack.c.b16 %v442, %v440
    %v583 = vpack.c.b16 %v443, %v441
    %v584 = vpack.c.b16 %v446, %v444
    %v585 = vpack.c.b16 %v447, %v445
    %v586 = vpack.c.b16 %v450, %v448
    %v587 = vpack.c.b16 %v451, %v449
    %v588 = vpack.c.b16 %v454, %v452
    %v589 = vpack.c.b16 %v455, %v453
    %v590 = vpack.c.b16 %v458, %v456
    %v591 = vpack.c.b16 %v459, %v457
    %v592 = vpack.c.b16 %v462, %v460
    %v593 = vpack.c.b16 %v463, %v461
    %v594 = vpack.c.b16 %v466, %v464
    %v595 = vpack.c.b16 %v467, %v465
    %v596 = vpack.c.b16 %v470, %v468
    %v597 = vpack.c.b16 %v471, %v469
    %v598 = vpack.c.b16 %v474, %v472
    %v599 = vpack.c.b16 %v475, %v473
    %v600 = vpack.c.b16 %v478, %v476
    %v601 = vpack.c.b16 %v479, %v477
    %v602 = vpack.c.b16 %v482, %v480
    %v603 = vpack.c.b16 %v483, %v481
    %v604 = vpack.c.b16 %v486, %v484
    %v605 = vpack.c.b16 %v487, %v485
    %v606 = vpack.c.b16 %v490, %v488
    %v607 = vpack.c.b16 %v491, %v489
    %v608 = vpack.c.b16 %v494, %v492
    %v609 = vpack.c.b16 %v495, %v493
    %v610 = vpack.c.b16 %v498, %v496
    %v611 = vpack.c.b16 %v499, %v497
    %v612 = vpack.c.b16 %v502, %v500
    %v613 = vpack.c.b16 %v503, %v501
    %v614 = vpack.c.b16 %v506, %v504
    %v615 = vpack.c.b16 %v507, %v505
    %v616 = vpack.c.b16 %v510, %v508
    %v617 = vpack.c.b16 %v511, %v509
    %v618 = vpack.c.b16 %v514, %v512
    %v619 = vpack.c.b16 %v515, %v513
    %v620 = vpack.c.b16 %v518, %v516
    %v621 = vpack.c.b16 %v519, %v517
    %v622 = vpack.c.b16 %v522, %v520
    %v623 = vpack.c.b16 %v523, %v521
    %v624 = vpack.c.b16 %v526, %v524
    %v625 = vpack.c.b16 %v527, %v525
    %vm724 = vcmask 130048
    %v726 = vsel %vm724, %v228, 0
    %728 = vmatpush.bf16.msra.mxu0 %v542
    %729 = vmatpush.bf16.msra.mxu0 %v540
    %730 = vmatpush.bf16.msra.mxu0 %v538
    %731 = vmatpush.bf16.msra.mxu0 %v536
    %732 = vmatpush.bf16.msra.mxu0 %v534
    %733 = vmatpush.bf16.msra.mxu0 %v532
    %734 = vmatpush.bf16.msra.mxu0 %v530
    %735 = vmatpush.bf16.msra.mxu0 %v528
    %736 = vmatmul.bf16.gmra.mxu0 %v222
    %v737 = vpop.f32.mrf.mxu0
    %v738 = vadd.f32 %v230, %v737
    %v739 = vpop.f32.mrf.mxu0
    %740 = vdwg.mxu0
    %741 = vmatpush.bf16.msra.mxu0 %v558
    %742 = vmatpush.bf16.msra.mxu0 %v556
    %743 = vmatpush.bf16.msra.mxu0 %v554
    %744 = vmatpush.bf16.msra.mxu0 %v552
    %745 = vmatpush.bf16.msra.mxu0 %v550
    %746 = vmatpush.bf16.msra.mxu0 %v548
    %747 = vmatpush.bf16.msra.mxu0 %v546
    %748 = vmatpush.bf16.msra.mxu0 %v544
    %749 = vmatmul.bf16.gmra.mxu0 %v223
    %v750 = vpop.f32.mrf.mxu0
    %v751 = vadd.f32 %v738, %v750
    %v752 = vpop.f32.mrf.mxu0
    %753 = vdwg.mxu0
    %754 = vmatpush.bf16.msra.mxu0 %v574
    %755 = vmatpush.bf16.msra.mxu0 %v572
    %756 = vmatpush.bf16.msra.mxu0 %v570
    %757 = vmatpush.bf16.msra.mxu0 %v568
    %758 = vmatpush.bf16.msra.mxu0 %v566
    %759 = vmatpush.bf16.msra.mxu0 %v564
    %760 = vmatpush.bf16.msra.mxu0 %v562
    %761 = vmatpush.bf16.msra.mxu0 %v560
    %762 = vmatmul.bf16.gmra.mxu0 %v224
    %v763 = vpop.f32.mrf.mxu0
    %v764 = vadd.f32 %v751, %v763
    %v765 = vpop.f32.mrf.mxu0
    %766 = vdwg.mxu0
    %767 = vmatpush.bf16.msra.mxu0 %v590
    %768 = vmatpush.bf16.msra.mxu0 %v588
    %769 = vmatpush.bf16.msra.mxu0 %v586
    %770 = vmatpush.bf16.msra.mxu0 %v584
    %771 = vmatpush.bf16.msra.mxu0 %v582
    %772 = vmatpush.bf16.msra.mxu0 %v580
    %773 = vmatpush.bf16.msra.mxu0 %v578
    %774 = vmatpush.bf16.msra.mxu0 %v576
    %775 = vmatmul.bf16.gmra.mxu0 %v225
    %v776 = vpop.f32.mrf.mxu0
    %v777 = vadd.f32 %v764, %v776
    %v778 = vpop.f32.mrf.mxu0
    %779 = vdwg.mxu0
    %780 = vmatpush.bf16.msra.mxu0 %v606
    %781 = vmatpush.bf16.msra.mxu0 %v604
    %782 = vmatpush.bf16.msra.mxu0 %v602
    %783 = vmatpush.bf16.msra.mxu0 %v600
    %784 = vmatpush.bf16.msra.mxu0 %v598
    %785 = vmatpush.bf16.msra.mxu0 %v596
    %786 = vmatpush.bf16.msra.mxu0 %v594
    %787 = vmatpush.bf16.msra.mxu0 %v592
    %788 = vmatmul.bf16.gmra.mxu0 %v226
    %v789 = vpop.f32.mrf.mxu0
    %v790 = vadd.f32 %v777, %v789
    %v791 = vpop.f32.mrf.mxu0
    %792 = vdwg.mxu0
    %793 = vmatpush.bf16.msra.mxu0 %v622
    %794 = vmatpush.bf16.msra.mxu0 %v620
    %795 = vmatpush.bf16.msra.mxu0 %v618
    %796 = vmatpush.bf16.msra.mxu0 %v616
    %797 = vmatpush.bf16.msra.mxu0 %v614
    %798 = vmatpush.bf16.msra.mxu0 %v612
    %799 = vmatpush.bf16.msra.mxu0 %v610
    %800 = vmatpush.bf16.msra.mxu0 %v608
    %801 = vmatmul.bf16.gmra.mxu0 %v227
    %v802 = vpop.f32.mrf.mxu0
    %v803 = vadd.f32 %v790, %v802
    %v804 = vpop.f32.mrf.mxu0
    %805 = vdwg.mxu0
    %806 = vmatpush.bf16.msra.mxu0 0
    %807 = vmatpush.bf16.msra.mxu0 0
    %808 = vmatpush.bf16.msra.mxu0 0
    %809 = vmatpush.bf16.msra.mxu0 0
    %810 = vmatpush.bf16.msra.mxu0 0
    %811 = vmatpush.bf16.msra.mxu0 0
    %812 = vmatpush.bf16.msra.mxu0 0
    %813 = vmatpush.bf16.msra.mxu0 %v624
    %814 = vmatmul.bf16.gmra.mxu0 %v726
    %v815 = vpop.f32.mrf.mxu0
    %v816 = vadd.f32 %v803, %v815
    %v817 = vpop.f32.mrf.mxu0
    %818 = vdwg.mxu0
    %819 = vmatpush.bf16.msra.mxu0 %v543
    %820 = vmatpush.bf16.msra.mxu0 %v541
    %821 = vmatpush.bf16.msra.mxu0 %v539
    %822 = vmatpush.bf16.msra.mxu0 %v537
    %823 = vmatpush.bf16.msra.mxu0 %v535
    %824 = vmatpush.bf16.msra.mxu0 %v533
    %825 = vmatpush.bf16.msra.mxu0 %v531
    %826 = vmatpush.bf16.msra.mxu0 %v529
    %827 = vmatmul.bf16.gmra.mxu0 %v222
    %v828 = vpop.f32.mrf.mxu0
    %v829 = vadd.f32 %v231, %v828
    %v830 = vpop.f32.mrf.mxu0
    %831 = vdwg.mxu0
    %832 = vmatpush.bf16.msra.mxu0 %v559
    %833 = vmatpush.bf16.msra.mxu0 %v557
    %834 = vmatpush.bf16.msra.mxu0 %v555
    %835 = vmatpush.bf16.msra.mxu0 %v553
    %836 = vmatpush.bf16.msra.mxu0 %v551
    %837 = vmatpush.bf16.msra.mxu0 %v549
    %838 = vmatpush.bf16.msra.mxu0 %v547
    %839 = vmatpush.bf16.msra.mxu0 %v545
    %840 = vmatmul.bf16.gmra.mxu0 %v223
    %v841 = vpop.f32.mrf.mxu0
    %v842 = vadd.f32 %v829, %v841
    %v843 = vpop.f32.mrf.mxu0
    %844 = vdwg.mxu0
    %845 = vmatpush.bf16.msra.mxu0 %v575
    %846 = vmatpush.bf16.msra.mxu0 %v573
    %847 = vmatpush.bf16.msra.mxu0 %v571
    %848 = vmatpush.bf16.msra.mxu0 %v569
    %849 = vmatpush.bf16.msra.mxu0 %v567
    %850 = vmatpush.bf16.msra.mxu0 %v565
    %851 = vmatpush.bf16.msra.mxu0 %v563
    %852 = vmatpush.bf16.msra.mxu0 %v561
    %853 = vmatmul.bf16.gmra.mxu0 %v224
    %v854 = vpop.f32.mrf.mxu0
    %v855 = vadd.f32 %v842, %v854
    %v856 = vpop.f32.mrf.mxu0
    %857 = vdwg.mxu0
    %858 = vmatpush.bf16.msra.mxu0 %v591
    %859 = vmatpush.bf16.msra.mxu0 %v589
    %860 = vmatpush.bf16.msra.mxu0 %v587
    %861 = vmatpush.bf16.msra.mxu0 %v585
    %862 = vmatpush.bf16.msra.mxu0 %v583
    %863 = vmatpush.bf16.msra.mxu0 %v581
    %864 = vmatpush.bf16.msra.mxu0 %v579
    %865 = vmatpush.bf16.msra.mxu0 %v577
    %866 = vmatmul.bf16.gmra.mxu0 %v225
    %v867 = vpop.f32.mrf.mxu0
    %v868 = vadd.f32 %v855, %v867
    %v869 = vpop.f32.mrf.mxu0
    %870 = vdwg.mxu0
    %871 = vmatpush.bf16.msra.mxu0 %v607
    %872 = vmatpush.bf16.msra.mxu0 %v605
    %873 = vmatpush.bf16.msra.mxu0 %v603
    %874 = vmatpush.bf16.msra.mxu0 %v601
    %875 = vmatpush.bf16.msra.mxu0 %v599
    %876 = vmatpush.bf16.msra.mxu0 %v597
    %877 = vmatpush.bf16.msra.mxu0 %v595
    %878 = vmatpush.bf16.msra.mxu0 %v593
    %879 = vmatmul.bf16.gmra.mxu0 %v226
    %v880 = vpop.f32.mrf.mxu0
    %v881 = vadd.f32 %v868, %v880
    %v882 = vpop.f32.mrf.mxu0
    %883 = vdwg.mxu0
    %884 = vmatpush.bf16.msra.mxu0 %v623
    %885 = vmatpush.bf16.msra.mxu0 %v621
    %886 = vmatpush.bf16.msra.mxu0 %v619
    %887 = vmatpush.bf16.msra.mxu0 %v617
    %888 = vmatpush.bf16.msra.mxu0 %v615
    %889 = vmatpush.bf16.msra.mxu0 %v613
    %890 = vmatpush.bf16.msra.mxu0 %v611
    %891 = vmatpush.bf16.msra.mxu0 %v609
    %892 = vmatmul.bf16.gmra.mxu0 %v227
    %v893 = vpop.f32.mrf.mxu0
    %v894 = vadd.f32 %v881, %v893
    %v895 = vpop.f32.mrf.mxu0
    %896 = vdwg.mxu0
    %897 = vmatpush.bf16.msra.mxu0 0
    %898 = vmatpush.bf16.msra.mxu0 0
    %899 = vmatpush.bf16.msra.mxu0 0
    %900 = vmatpush.bf16.msra.mxu0 0
    %901 = vmatpush.bf16.msra.mxu0 0
    %902 = vmatpush.bf16.msra.mxu0 0
    %903 = vmatpush.bf16.msra.mxu0 0
    %904 = vmatpush.bf16.msra.mxu0 %v625
    %905 = vmatmul.bf16.gmra.mxu0 %v726
    %v906 = vpop.f32.mrf.mxu0
    %v907 = vadd.f32 %v894, %v906
    %v908 = vpop.f32.mrf.mxu0
    %909 = vdwg.mxu0
    %v910 = vmax.f32 %v816, 0.0
    %v911 = vmax.f32 %v907, 0.0
    %v912 = vld [vmem:[%s3] sm:$0xf]
    %v913 = vld [vmem:[%s3 + $0x4] sm:$0xf]
    %v914 = vld [vmem:[%s3 + $0x8] sm:$0xf]
    %v915 = vld [vmem:[%s3 + $0xc] sm:$0xf]
    %v916 = vld [vmem:[%s3 + $0x10] sm:$0xf]
    %v917 = vld [vmem:[%s3 + $0x14] sm:$0xf]
    %v918 = vld [vmem:[%s3 + $0x18] sm:$0xf]
    %v919 = vld [vmem:[%s3 + $0x1c] sm:$0xf]
    %v920 = vld [vmem:[%s3 + $0x20] sm:$0xf]
    %v921 = vld [vmem:[%s3 + $0x24] sm:$0xf]
    %v922 = vld [vmem:[%s3 + $0x28] sm:$0xf]
    %v923 = vld [vmem:[%s3 + $0x2c] sm:$0xf]
    %v924 = vld [vmem:[%s3 + $0x30] sm:$0xf]
    %v925 = vld [vmem:[%s3 + $0x34] sm:$0xf]
    %v926 = vld [vmem:[%s3 + $0x38] sm:$0xf]
    %v927 = vld [vmem:[%s3 + $0x3c] sm:$0xf]
    %v928 = vld [vmem:[%s3 + $0x40] sm:$0xf]
    %v929 = vld [vmem:[%s3 + $0x44] sm:$0xf]
    %v930 = vld [vmem:[%s3 + $0x48] sm:$0xf]
    %v931 = vld [vmem:[%s3 + $0x4c] sm:$0xf]
    %v932 = vld [vmem:[%s3 + $0x50] sm:$0xf]
    %v933 = vld [vmem:[%s3 + $0x54] sm:$0xf]
    %v934 = vld [vmem:[%s3 + $0x58] sm:$0xf]
    %v935 = vld [vmem:[%s3 + $0x5c] sm:$0xf]
    %v936 = vld [vmem:[%s3 + $0x60] sm:$0xf]
    %v937 = vld [vmem:[%s3 + $0x64] sm:$0xf]
    %v938 = vld [vmem:[%s3 + $0x68] sm:$0xf]
    %v939 = vld [vmem:[%s3 + $0x6c] sm:$0xf]
    %v940 = vld [vmem:[%s3 + $0x70] sm:$0xf]
    %v941 = vld [vmem:[%s3 + $0x74] sm:$0xf]
    %v942 = vld [vmem:[%s3 + $0x78] sm:$0xf]
    %v943 = vld [vmem:[%s3 + $0x7c] sm:$0xf]
    %v944 = vld [vmem:[%s4] sm:$0x1]
    %v945 = vpack.c.bf16 %v910, %v910
    %v946 = vpack.c.bf16 %v911, %v911
    %v948 = vperm.slane %v944, 0
    %v982 = vunpack.c.l.b16 %v912
    %v983 = vunpack.c.l.b16 %v913
    %v984 = vunpack.c.l.b16 %v914
    %v985 = vunpack.c.l.b16 %v915
    %v986 = vunpack.c.l.b16 %v916
    %v987 = vunpack.c.l.b16 %v917
    %v988 = vunpack.c.l.b16 %v918
    %v989 = vunpack.c.l.b16 %v919
    %v990 = vunpack.c.l.b16 %v920
    %v991 = vunpack.c.l.b16 %v921
    %v992 = vunpack.c.l.b16 %v922
    %v993 = vunpack.c.l.b16 %v923
    %v994 = vunpack.c.l.b16 %v924
    %v995 = vunpack.c.l.b16 %v925
    %v996 = vunpack.c.l.b16 %v926
    %v997 = vunpack.c.l.b16 %v927
    %v998 = vunpack.c.l.b16 %v928
    %v999 = vunpack.c.l.b16 %v929
    %v1000 = vunpack.c.l.b16 %v930
    %v1001 = vunpack.c.l.b16 %v931
    %v1002 = vunpack.c.l.b16 %v932
    %v1003 = vunpack.c.l.b16 %v933
    %v1004 = vunpack.c.l.b16 %v934
    %v1005 = vunpack.c.l.b16 %v935
    %v1006 = vunpack.c.l.b16 %v936
    %v1007 = vunpack.c.l.b16 %v937
    %v1008 = vunpack.c.l.b16 %v938
    %v1009 = vunpack.c.l.b16 %v939
    %v1010 = vunpack.c.l.b16 %v940
    %v1011 = vunpack.c.l.b16 %v941
    %v1012 = vunpack.c.l.b16 %v942
    %v1013 = vunpack.c.l.b16 %v943
    %v1014 = vpack.c.b16 %v983, %v982
    %v1015 = vpack.c.b16 %v985, %v984
    %v1016 = vpack.c.b16 %v987, %v986
    %v1017 = vpack.c.b16 %v989, %v988
    %v1018 = vpack.c.b16 %v991, %v990
    %v1019 = vpack.c.b16 %v993, %v992
    %v1020 = vpack.c.b16 %v995, %v994
    %v1021 = vpack.c.b16 %v997, %v996
    %v1022 = vpack.c.b16 %v999, %v998
    %v1023 = vpack.c.b16 %v1001, %v1000
    %v1024 = vpack.c.b16 %v1003, %v1002
    %v1025 = vpack.c.b16 %v1005, %v1004
    %v1026 = vpack.c.b16 %v1007, %v1006
    %v1027 = vpack.c.b16 %v1009, %v1008
    %v1028 = vpack.c.b16 %v1011, %v1010
    %v1029 = vpack.c.b16 %v1013, %v1012
    %1046 = vmatpush.bf16.msra.mxu0 %v1021
    %1047 = vmatpush.bf16.msra.mxu0 %v1020
    %1048 = vmatpush.bf16.msra.mxu0 %v1019
    %1049 = vmatpush.bf16.msra.mxu0 %v1018
    %1050 = vmatpush.bf16.msra.mxu0 %v1017
    %1051 = vmatpush.bf16.msra.mxu0 %v1016
    %1052 = vmatpush.bf16.msra.mxu0 %v1015
    %1053 = vmatpush.bf16.msra.mxu0 %v1014
    %1054 = vmatmul.bf16.gmra.mxu0 %v945
    %v1055 = vpop.f32.mrf.mxu0
    %v1056 = vadd.f32 %v948, %v1055
    %v1057 = vpop.f32.mrf.mxu0
    %1058 = vdwg.mxu0
    %1059 = vmatpush.bf16.msra.mxu0 %v1029
    %1060 = vmatpush.bf16.msra.mxu0 %v1028
    %1061 = vmatpush.bf16.msra.mxu0 %v1027
    %1062 = vmatpush.bf16.msra.mxu0 %v1026
    %1063 = vmatpush.bf16.msra.mxu0 %v1025
    %1064 = vmatpush.bf16.msra.mxu0 %v1024
    %1065 = vmatpush.bf16.msra.mxu0 %v1023
    %1066 = vmatpush.bf16.msra.mxu0 %v1022
    %1067 = vmatmul.bf16.gmra.mxu0 %v946
    %v1068 = vpop.f32.mrf.mxu0
    %v1069 = vadd.f32 %v1056, %v1068
    %v1070 = vpop.f32.mrf.mxu0
    %1071 = vdwg.mxu0
    %v1072 = vmax.f32 %v1069, 0.0
    %v1073 = vld [vmem:[%s5] sm:$0xf]
    %v1074 = vld [vmem:[%s5 + $0x4] sm:$0xf]
    %v1075 = vld [vmem:[%s5 + $0x8] sm:$0xf]
    %v1076 = vld [vmem:[%s5 + $0xc] sm:$0xf]
    %v1077 = vld [vmem:[%s5 + $0x10] sm:$0xf]
    %v1078 = vld [vmem:[%s5 + $0x14] sm:$0xf]
    %v1079 = vld [vmem:[%s5 + $0x18] sm:$0xf]
    %v1080 = vld [vmem:[%s5 + $0x1c] sm:$0xf]
    %v1081 = vld [vmem:[%s5 + $0x20] sm:$0xf]
    %v1082 = vld [vmem:[%s5 + $0x24] sm:$0xf]
    %v1083 = vld [vmem:[%s5 + $0x28] sm:$0xf]
    %v1084 = vld [vmem:[%s5 + $0x2c] sm:$0xf]
    %v1085 = vld [vmem:[%s5 + $0x30] sm:$0xf]
    %v1086 = vld [vmem:[%s5 + $0x34] sm:$0xf]
    %v1087 = vld [vmem:[%s5 + $0x38] sm:$0xf]
    %v1088 = vld [vmem:[%s5 + $0x3c] sm:$0xf]
    %v1089 = vld [vmem:[%s6] sm:$0x1]
    %v1090 = vpack.c.bf16 %v1072, %v1072
    %v1092 = vperm.slane %v1089, 0
    %v1110 = vunpack.c.l.b16 %v1073
    %v1111 = vunpack.c.l.b16 %v1074
    %v1112 = vunpack.c.l.b16 %v1075
    %v1113 = vunpack.c.l.b16 %v1076
    %v1114 = vunpack.c.l.b16 %v1077
    %v1115 = vunpack.c.l.b16 %v1078
    %v1116 = vunpack.c.l.b16 %v1079
    %v1117 = vunpack.c.l.b16 %v1080
    %v1118 = vunpack.c.l.b16 %v1081
    %v1119 = vunpack.c.l.b16 %v1082
    %v1120 = vunpack.c.l.b16 %v1083
    %v1121 = vunpack.c.l.b16 %v1084
    %v1122 = vunpack.c.l.b16 %v1085
    %v1123 = vunpack.c.l.b16 %v1086
    %v1124 = vunpack.c.l.b16 %v1087
    %v1125 = vunpack.c.l.b16 %v1088
    %v1126 = vpack.c.b16 %v1111, %v1110
    %v1127 = vpack.c.b16 %v1113, %v1112
    %v1128 = vpack.c.b16 %v1115, %v1114
    %v1129 = vpack.c.b16 %v1117, %v1116
    %v1130 = vpack.c.b16 %v1119, %v1118
    %v1131 = vpack.c.b16 %v1121, %v1120
    %v1132 = vpack.c.b16 %v1123, %v1122
    %v1133 = vpack.c.b16 %v1125, %v1124
    %1142 = vmatpush.bf16.msra.mxu0 %v1133
    %1143 = vmatpush.bf16.msra.mxu0 %v1132
    %1144 = vmatpush.bf16.msra.mxu0 %v1131
    %1145 = vmatpush.bf16.msra.mxu0 %v1130
    %1146 = vmatpush.bf16.msra.mxu0 %v1129
    %1147 = vmatpush.bf16.msra.mxu0 %v1128
    %1148 = vmatpush.bf16.msra.mxu0 %v1127
    %1149 = vmatpush.bf16.msra.mxu0 %v1126
    %1150 = vmatmul.bf16.gmra.mxu0 %v1090
    %v1151 = vpop.f32.mrf.mxu0
    %v1152 = vadd.f32 %v1092, %v1151
    %v1153 = vpop.f32.mrf.mxu0
    %1154 = vdwg.mxu0
    %v1155 = vmax.f32 %v1152, 0.0
    %v1156 = vld [vmem:[%s7] sm:$0xf]
    %v1157 = vld [vmem:[%s7 + $0x4] sm:$0xf]
    %v1158 = vld [vmem:[%s7 + $0x8] sm:$0xf]
    %v1159 = vld [vmem:[%s7 + $0xc] sm:$0xf]
    %v1160 = vld [vmem:[%s7 + $0x10] sm:$0xf]
    %v1161 = vld [vmem:[%s7 + $0x14] sm:$0xf]
    %v1162 = vld [vmem:[%s7 + $0x18] sm:$0xf]
    %v1163 = vld [vmem:[%s7 + $0x1c] sm:$0xf]
    %v1164 = vld [vmem:[%s8] sm:$0x1]
    %v1165 = vpack.c.bf16 %v1155, %v1155
    %v1167 = vperm.slane %v1164, 0
    %v1177 = vunpack.c.l.b16 %v1156
    %v1178 = vunpack.c.l.b16 %v1157
    %v1179 = vunpack.c.l.b16 %v1158
    %v1180 = vunpack.c.l.b16 %v1159
    %v1181 = vunpack.c.l.b16 %v1160
    %v1182 = vunpack.c.l.b16 %v1161
    %v1183 = vunpack.c.l.b16 %v1162
    %v1184 = vunpack.c.l.b16 %v1163
    %v1185 = vpack.c.b16 %v1178, %v1177
    %v1186 = vpack.c.b16 %v1180, %v1179
    %v1187 = vpack.c.b16 %v1182, %v1181
    %v1188 = vpack.c.b16 %v1184, %v1183
    %vm1193 = vcmask 523264
    %v1195 = vsel %vm1193, %v1165, 0
    %1197 = vmatpush.bf16.msra.mxu0 0
    %1198 = vmatpush.bf16.msra.mxu0 0
    %1199 = vmatpush.bf16.msra.mxu0 0
    %1200 = vmatpush.bf16.msra.mxu0 0
    %1201 = vmatpush.bf16.msra.mxu0 %v1188
    %1202 = vmatpush.bf16.msra.mxu0 %v1187
    %1203 = vmatpush.bf16.msra.mxu0 %v1186
    %1204 = vmatpush.bf16.msra.mxu0 %v1185
    %1205 = vmatmul.bf16.gmra.mxu0 %v1195
    %v1206 = vpop.f32.mrf.mxu0
    %v1207 = vadd.f32 %v1167, %v1206
    %v1208 = vpop.f32.mrf.mxu0
    %1209 = vdwg.mxu0
    %v1210 = vmax.f32 %v1207, 0.0
    %v1211 = vld [vmem:[%s9] sm:$0xf]
    %v1212 = vld [vmem:[%s9 + $0x4] sm:$0xf]
    %v1213 = vld [vmem:[%s9 + $0x8] sm:$0xf]
    %v1214 = vld [vmem:[%s9 + $0xc] sm:$0xf]
    %v1215 = vld [vmem:[%s10] sm:$0x1]
    %v1216 = vpack.c.bf16 %v1210, %v1210
    %v1218 = vperm.slane %v1215, 0
    %v1224 = vunpack.c.l.b16 %v1211
    %v1225 = vunpack.c.l.b16 %v1212
    %v1226 = vunpack.c.l.b16 %v1213
    %v1227 = vunpack.c.l.b16 %v1214
    %v1228 = vpack.c.b16 %v1225, %v1224
    %v1229 = vpack.c.b16 %v1227, %v1226
    %vm1232 = vcmask 261120
    %v1234 = vsel %vm1232, %v1216, 0
    %1236 = vmatpush.bf16.msra.mxu0 0
    %1237 = vmatpush.bf16.msra.mxu0 0
    %1238 = vmatpush.bf16.msra.mxu0 0
    %1239 = vmatpush.bf16.msra.mxu0 0
    %1240 = vmatpush.bf16.msra.mxu0 0
    %1241 = vmatpush.bf16.msra.mxu0 0
    %1242 = vmatpush.bf16.msra.mxu0 %v1229
    %1243 = vmatpush.bf16.msra.mxu0 %v1228
    %1244 = vmatmul.bf16.gmra.mxu0 %v1234
    %v1245 = vpop.f32.mrf.mxu0
    %v1246 = vadd.f32 %v1218, %v1245
    %v1247 = vpop.f32.mrf.mxu0
    %1248 = vdwg.mxu0
    %v1249 = vmax.f32 %v1246, 0.0
    %v1250 = vld [vmem:[#allocation5] sm:$0xff]
    %v1251 = vld [vmem:[#allocation5 + $0x8] sm:$0xff]
    %v1252 = vld [vmem:[#allocation5 + $0x10] sm:$0xff]
    %v1253 = vld [vmem:[#allocation5 + $0x18] sm:$0xf]
    %v1254 = vld [vmem:[#allocation5 + $0x1c] sm:$0xff]
    %v1255 = vld [vmem:[#allocation5 + $0x24] sm:$0xff]
    %v1256 = vld [vmem:[#allocation5 + $0x2c] sm:$0xff]
    %v1257 = vld [vmem:[#allocation5 + $0x34] sm:$0xf]
    %v1258 = vld [vmem:[#allocation5 + $0x38] sm:$0xff]
    %v1259 = vld [vmem:[#allocation5 + $0x40] sm:$0xff]
    %v1260 = vld [vmem:[#allocation5 + $0x48] sm:$0xff]
    %v1261 = vld [vmem:[#allocation5 + $0x50] sm:$0xf]
    %v1262 = vld [vmem:[#allocation5 + $0x54] sm:$0xff]
    %v1263 = vld [vmem:[#allocation5 + $0x5c] sm:$0xff]
    %v1264 = vld [vmem:[#allocation5 + $0x64] sm:$0xff]
    %v1265 = vld [vmem:[#allocation5 + $0x6c] sm:$0xf]
    %v1266 = vld [vmem:[#allocation5 + $0x70] sm:$0xff]
    %v1267 = vld [vmem:[#allocation5 + $0x78] sm:$0xff]
    %v1268 = vld [vmem:[#allocation5 + $0x80] sm:$0xff]
    %v1269 = vld [vmem:[#allocation5 + $0x88] sm:$0xf]
    %v1270 = vld [vmem:[#allocation5 + $0x8c] sm:$0xff]
    %v1271 = vld [vmem:[#allocation5 + $0x94] sm:$0xff]
    %v1272 = vld [vmem:[#allocation5 + $0x9c] sm:$0xff]
    %v1273 = vld [vmem:[#allocation5 + $0xa4] sm:$0xf]
    %v1274 = vld [vmem:[#allocation5 + $0xa8] sm:$0xff]
    %v1275 = vld [vmem:[#allocation5 + $0xb0] sm:$0xff]
    %v1276 = vld [vmem:[#allocation5 + $0xb8] sm:$0xff]
    %v1277 = vld [vmem:[#allocation5 + $0xc0] sm:$0xf]
    %v1278 = vld [vmem:[#allocation5 + $0xc4] sm:$0xff]
    %v1279 = vld [vmem:[#allocation5 + $0xcc] sm:$0xff]
    %v1280 = vld [vmem:[#allocation5 + $0xd4] sm:$0xff]
    %v1281 = vld [vmem:[#allocation5 + $0xdc] sm:$0xf]
    %v1282 = vld [vmem:[%s12] sm:$0x7f]
    %v1283 = vpack.c.bf16 %v1249, %v1249
    %v1285 = vperm.slane %v1282, 0
    %v1286 = vperm.slane %v1282, 1
    %v1287 = vperm.slane %v1282, 2
    %v1288 = vperm.slane %v1282, 3
    %v1289 = vperm.slane %v1282, 4
    %v1290 = vperm.slane %v1282, 5
    %v1291 = vperm.slane %v1282, 6
    %v1331 = vunpack.c.l.b16 %v1250
    %v1332 = vunpack.c.h.b16 %v1250
    %v1333 = vunpack.c.l.b16 %v1251
    %v1334 = vunpack.c.h.b16 %v1251
    %v1335 = vunpack.c.l.b16 %v1252
    %v1336 = vunpack.c.h.b16 %v1252
    %v1337 = vunpack.c.l.b16 %v1253
    %v1338 = vunpack.c.l.b16 %v1254
    %v1339 = vunpack.c.h.b16 %v1254
    %v1340 = vunpack.c.l.b16 %v1255
    %v1341 = vunpack.c.h.b16 %v1255
    %v1342 = vunpack.c.l.b16 %v1256
    %v1343 = vunpack.c.h.b16 %v1256
    %v1344 = vunpack.c.l.b16 %v1257
    %v1345 = vunpack.c.l.b16 %v1258
    %v1346 = vunpack.c.h.b16 %v1258
    %v1347 = vunpack.c.l.b16 %v1259
    %v1348 = vunpack.c.h.b16 %v1259
    %v1349 = vunpack.c.l.b16 %v1260
    %v1350 = vunpack.c.h.b16 %v1260
    %v1351 = vunpack.c.l.b16 %v1261
    %v1352 = vunpack.c.l.b16 %v1262
    %v1353 = vunpack.c.h.b16 %v1262
    %v1354 = vunpack.c.l.b16 %v1263
    %v1355 = vunpack.c.h.b16 %v1263
    %v1356 = vunpack.c.l.b16 %v1264
    %v1357 = vunpack.c.h.b16 %v1264
    %v1358 = vunpack.c.l.b16 %v1265
    %v1359 = vunpack.c.l.b16 %v1266
    %v1360 = vunpack.c.h.b16 %v1266
    %v1361 = vunpack.c.l.b16 %v1267
    %v1362 = vunpack.c.h.b16 %v1267
    %v1363 = vunpack.c.l.b16 %v1268
    %v1364 = vunpack.c.h.b16 %v1268
    %v1365 = vunpack.c.l.b16 %v1269
    %v1366 = vunpack.c.l.b16 %v1270
    %v1367 = vunpack.c.h.b16 %v1270
    %v1368 = vunpack.c.l.b16 %v1271
    %v1369 = vunpack.c.h.b16 %v1271
    %v1370 = vunpack.c.l.b16 %v1272
    %v1371 = vunpack.c.h.b16 %v1272
    %v1372 = vunpack.c.l.b16 %v1273
    %v1373 = vunpack.c.l.b16 %v1274
    %v1374 = vunpack.c.h.b16 %v1274
    %v1375 = vunpack.c.l.b16 %v1275
    %v1376 = vunpack.c.h.b16 %v1275
    %v1377 = vunpack.c.l.b16 %v1276
    %v1378 = vunpack.c.h.b16 %v1276
    %v1379 = vunpack.c.l.b16 %v1277
    %v1380 = vunpack.c.l.b16 %v1278
    %v1381 = vunpack.c.h.b16 %v1278
    %v1382 = vunpack.c.l.b16 %v1279
    %v1383 = vunpack.c.h.b16 %v1279
    %v1384 = vunpack.c.l.b16 %v1280
    %v1385 = vunpack.c.h.b16 %v1280
    %v1386 = vunpack.c.l.b16 %v1281
    %v1387 = vpack.c.b16 %v1338, %v1331
    %v1388 = vpack.c.b16 %v1339, %v1332
    %v1389 = vpack.c.b16 %v1340, %v1333
    %v1390 = vpack.c.b16 %v1341, %v1334
    %v1391 = vpack.c.b16 %v1342, %v1335
    %v1392 = vpack.c.b16 %v1343, %v1336
    %v1393 = vpack.c.b16 %v1344, %v1337
    %v1394 = vpack.c.b16 %v1352, %v1345
    %v1395 = vpack.c.b16 %v1353, %v1346
    %v1396 = vpack.c.b16 %v1354, %v1347
    %v1397 = vpack.c.b16 %v1355, %v1348
    %v1398 = vpack.c.b16 %v1356, %v1349
    %v1399 = vpack.c.b16 %v1357, %v1350
    %v1400 = vpack.c.b16 %v1358, %v1351
    %v1401 = vpack.c.b16 %v1366, %v1359
    %v1402 = vpack.c.b16 %v1367, %v1360
    %v1403 = vpack.c.b16 %v1368, %v1361
    %v1404 = vpack.c.b16 %v1369, %v1362
    %v1405 = vpack.c.b16 %v1370, %v1363
    %v1406 = vpack.c.b16 %v1371, %v1364
    %v1407 = vpack.c.b16 %v1372, %v1365
    %v1408 = vpack.c.b16 %v1380, %v1373
    %v1409 = vpack.c.b16 %v1381, %v1374
    %v1410 = vpack.c.b16 %v1382, %v1375
    %v1411 = vpack.c.b16 %v1383, %v1376
    %v1412 = vpack.c.b16 %v1384, %v1377
    %v1413 = vpack.c.b16 %v1385, %v1378
    %v1414 = vpack.c.b16 %v1386, %v1379
    %v1444 = vsel %vm1193, %v1283, 0
    %1446 = vmatpush.bf16.msra.mxu0 0
    %1447 = vmatpush.bf16.msra.mxu0 0
    %1448 = vmatpush.bf16.msra.mxu0 0
    %1449 = vmatpush.bf16.msra.mxu0 0
    %1450 = vmatpush.bf16.msra.mxu0 %v1408
    %1451 = vmatpush.bf16.msra.mxu0 %v1401
    %1452 = vmatpush.bf16.msra.mxu0 %v1394
    %1453 = vmatpush.bf16.msra.mxu0 %v1387
    %1454 = vmatmul.bf16.gmra.mxu0 %v1444
    %v1455 = vpop.f32.mrf.mxu0
    %v1456 = vadd.f32 %v1285, %v1455
    %v1457 = vpop.f32.mrf.mxu0
    %1458 = vdwg.mxu0
    %1459 = vmatpush.bf16.msra.mxu0 0
    %1460 = vmatpush.bf16.msra.mxu0 0
    %1461 = vmatpush.bf16.msra.mxu0 0
    %1462 = vmatpush.bf16.msra.mxu0 0
    %1463 = vmatpush.bf16.msra.mxu0 %v1409
    %1464 = vmatpush.bf16.msra.mxu0 %v1402
    %1465 = vmatpush.bf16.msra.mxu0 %v1395
    %1466 = vmatpush.bf16.msra.mxu0 %v1388
    %1467 = vmatmul.bf16.gmra.mxu0 %v1444
    %v1468 = vpop.f32.mrf.mxu0
    %v1469 = vadd.f32 %v1286, %v1468
    %v1470 = vpop.f32.mrf.mxu0
    %1471 = vdwg.mxu0
    %1472 = vmatpush.bf16.msra.mxu0 0
    %1473 = vmatpush.bf16.msra.mxu0 0
    %1474 = vmatpush.bf16.msra.mxu0 0
    %1475 = vmatpush.bf16.msra.mxu0 0
    %1476 = vmatpush.bf16.msra.mxu0 %v1410
    %1477 = vmatpush.bf16.msra.mxu0 %v1403
    %1478 = vmatpush.bf16.msra.mxu0 %v1396
    %1479 = vmatpush.bf16.msra.mxu0 %v1389
    %1480 = vmatmul.bf16.gmra.mxu0 %v1444
    %v1481 = vpop.f32.mrf.mxu0
    %v1482 = vadd.f32 %v1287, %v1481
    %v1483 = vpop.f32.mrf.mxu0
    %1484 = vdwg.mxu0
    %1485 = vmatpush.bf16.msra.mxu0 0
    %1486 = vmatpush.bf16.msra.mxu0 0
    %1487 = vmatpush.bf16.msra.mxu0 0
    %1488 = vmatpush.bf16.msra.mxu0 0
    %1489 = vmatpush.bf16.msra.mxu0 %v1411
    %1490 = vmatpush.bf16.msra.mxu0 %v1404
    %1491 = vmatpush.bf16.msra.mxu0 %v1397
    %1492 = vmatpush.bf16.msra.mxu0 %v1390
    %1493 = vmatmul.bf16.gmra.mxu0 %v1444
    %v1494 = vpop.f32.mrf.mxu0
    %v1495 = vadd.f32 %v1288, %v1494
    %v1496 = vpop.f32.mrf.mxu0
    %1497 = vdwg.mxu0
    %1498 = vmatpush.bf16.msra.mxu0 0
    %1499 = vmatpush.bf16.msra.mxu0 0
    %1500 = vmatpush.bf16.msra.mxu0 0
    %1501 = vmatpush.bf16.msra.mxu0 0
    %1502 = vmatpush.bf16.msra.mxu0 %v1412
    %1503 = vmatpush.bf16.msra.mxu0 %v1405
    %1504 = vmatpush.bf16.msra.mxu0 %v1398
    %1505 = vmatpush.bf16.msra.mxu0 %v1391
    %1506 = vmatmul.bf16.gmra.mxu0 %v1444
    %v1507 = vpop.f32.mrf.mxu0
    %v1508 = vadd.f32 %v1289, %v1507
    %v1509 = vpop.f32.mrf.mxu0
    %1510 = vdwg.mxu0
    %1511 = vmatpush.bf16.msra.mxu0 0
    %1512 = vmatpush.bf16.msra.mxu0 0
    %1513 = vmatpush.bf16.msra.mxu0 0
    %1514 = vmatpush.bf16.msra.mxu0 0
    %1515 = vmatpush.bf16.msra.mxu0 %v1413
    %1516 = vmatpush.bf16.msra.mxu0 %v1406
    %1517 = vmatpush.bf16.msra.mxu0 %v1399
    %1518 = vmatpush.bf16.msra.mxu0 %v1392
    %1519 = vmatmul.bf16.gmra.mxu0 %v1444
    %v1520 = vpop.f32.mrf.mxu0
    %v1521 = vadd.f32 %v1290, %v1520
    %v1522 = vpop.f32.mrf.mxu0
    %1523 = vdwg.mxu0
    %1524 = vmatpush.bf16.msra.mxu0 0
    %1525 = vmatpush.bf16.msra.mxu0 0
    %1526 = vmatpush.bf16.msra.mxu0 0
    %1527 = vmatpush.bf16.msra.mxu0 0
    %1528 = vmatpush.bf16.msra.mxu0 %v1414
    %1529 = vmatpush.bf16.msra.mxu0 %v1407
    %1530 = vmatpush.bf16.msra.mxu0 %v1400
    %1531 = vmatpush.bf16.msra.mxu0 %v1393
    %1532 = vmatmul.bf16.gmra.mxu0 %v1444
    %v1533 = vpop.f32.mrf.mxu0
    %v1534 = vadd.f32 %v1291, %v1533
    %v1535 = vpop.f32.mrf.mxu0
    %1536 = vdwg.mxu0
    %v1544 = vrot.slane %v1469, 6
    %v1545 = vrot.slane %v1482, 4
    %v1546 = vrot.slane %v1495, 2
    %v1547 = vrot.slane %v1521, 6
    %v1548 = vrot.slane %v1534, 4
    %vm1549 = vcmask 1041408
    %v1550 = vsel %vm1549, %v1456, %v1544
    %vm1551 = vcmask 1045508
    %v1552 = vsel %vm1551, %v1545, %v1546
    %vm1553 = vcmask 1043456
    %v1554 = vsel %vm1553, %v1550, %v1552
    %v1555 = vsel %vm1549, %v1508, %v1547
    %v1556 = vsel %vm1553, %v1555, %v1548
    %vm1557 = vcmask 1043458
    %v1558 = vsel %vm1557, %v1456, %v1544
    %vm1559 = vcmask 1045504
    %v1560 = vsel %vm1559, %v1546, %v1545
    %vm1561 = vcmask 1045506
    %v1562 = vsel %vm1561, %v1558, %v1560
    %v1563 = vrot.slane %v1562, 2
    %v1564 = vsel %vm1557, %v1508, %v1547
    %v1565 = vsel %vm1561, %v1564, %v1548
    %v1566 = vrot.slane %v1565, 2
    %v1567 = vsel %vm1551, %v1456, %v1544
    %v1568 = vsel %vm1549, %v1545, %v1546
    %v1569 = vsel %vm1553, %v1568, %v1567
    %v1570 = vrot.slane %v1569, 4
    %v1571 = vsel %vm1551, %v1508, %v1547
    %v1572 = vsel %vm1553, %v1548, %v1571
    %v1573 = vrot.slane %v1572, 4
    %v1574 = vsel %vm1559, %v1544, %v1456
    %v1575 = vsel %vm1557, %v1545, %v1546
    %v1576 = vsel %vm1561, %v1575, %v1574
    %v1577 = vrot.slane %v1576, 6
    %v1578 = vsel %vm1559, %v1547, %v1508
    %v1579 = vsel %vm1561, %v1548, %v1578
    %v1580 = vrot.slane %v1579, 6
    %1589 = vst [vmem:[#allocation7] sm:$0xff] %v1554
    %vm1590 = vmor %vm1557, %vm1549
    %vm1591 = vcmask 128004
    %vm1592 = vmor %vm1591, %vm1590
    %1593 = vst.msk [vmem:[#allocation7 + $0x8] sm:$0x3f] %vm1592, %v1556
    %1594 = vst [vmem:[#allocation7 + $0xe] sm:$0xff] %v1563
    %1595 = vst.msk [vmem:[#allocation7 + $0x16] sm:$0x3f] %vm1592, %v1566
    %1596 = vst [vmem:[#allocation7 + $0x1c] sm:$0xff] %v1570
    %1597 = vst.msk [vmem:[#allocation7 + $0x24] sm:$0x3f] %vm1592, %v1573
    %1598 = vst [vmem:[#allocation7 + $0x2a] sm:$0xff] %v1577
    %1599 = vst.msk [vmem:[#allocation7 + $0x32] sm:$0x3f] %vm1592, %v1580
    // Predicated region
    $region62: #{autoencoder_forward.1} parent=1 // pred_check
      _
    $region63: #{autoencoder_forward.1} parent=1 // pred_check_branch
      %1601 = sbr.rel (0) target = $region65
    $region64: #{autoencoder_forward.1} parent=1 // pred_region
      %1603 = vsyncadd [#allocation4], 672
      %s1604 = sshll.u32 [#allocation7], 4
      %s1605 = int_to_ptr.vmem [resolvable:$true] %s1604
      %s1606 = sshll.u32 %s13, 4
      %s1607 = int_to_ptr.hbm [resolvable:$true] %s1606
      %1612 = dma.vmem_to_hbm [thread:$0]  %s1605, 224, %s1607, [#allocation4], 224, 224, 14
    $region65: #{autoencoder_forward.1} parent=1 // pred_fallthru
      _
    // Predicated region
    $region66: #{autoencoder_forward.1} parent=1 // pred_check
      _
    $region67: #{autoencoder_forward.1} parent=1 // pred_check_branch
      %1614 = sbr.rel (0) target = $region69
    $region68: #{autoencoder_forward.1} parent=1 // pred_region
      %1616 = dma.done [#allocation4], 896
    $region69: #{autoencoder_forward.1} parent=1 // pred_fallthru
      _
    %1617 = vsyncpa [#allocation3], 1
    %1618 = vsyncpa [#allocation6], 1
    %1619 = vsyncpa [#allocation4], 1

</llo_original>
